<compile_context>
chip_gen: v5e
topology: v5e:2x2
jax: 0.10.0
libtpu: 0.0.40
codegen_flags: <defaults>
</compile_context>

<pallas_src>
import functools

import jax
import jax.numpy as jnp
from jax import lax
from jax.experimental import pallas as pl
from jax.experimental.pallas import tpu as pltpu


def _rmrs_kernel(x_ref, w_ref, b_ref, o_ref, xpf_ref, patch_ref, *, W, pad):
    # x_ref    : (Cin, S)          one image, spatial flattened (S = H*W)
    # w_ref    : (3, Cb, 9*Cin)    per-branch im2col weight matrices
    # b_ref    : (3, Cb, 1)        per-branch bias
    # o_ref    : (3*Cb, S)         lane-dense output (channels in sublanes)
    # xpf_ref  : (Cin, S + 2*pad)  zero-padded copy of the image (VMEM scratch)
    # patch_ref: (9*Cin, S)        im2col patch matrix (VMEM scratch, reused)
    cin, S = x_ref.shape
    cout = o_ref.shape[0]
    cb = cout // 3

    # Refresh the zero halo and the image interior of the padded scratch.
    # (Done every step so it is correct regardless of megacore grid split.)
    zeros_pad = jnp.zeros((cin, pad), jnp.float32)
    xpf_ref[:, 0:pad] = zeros_pad
    xpf_ref[:, pad + S:pad + S + pad] = zeros_pad
    xpf_ref[:, pad:pad + S] = x_ref[...]

    # Column index of every flattened position (for horizontal-edge masks).
    col = lax.broadcasted_iota(jnp.int32, (cin, S), 1) % W

    for br in range(3):                      # static unroll, dilation d = br+1
        d = br + 1
        m_left = col >= d                    # valid positions when dx = -d
        m_right = col < (W - d)              # valid positions when dx = +d

        # Build the (9*Cin, S) patch matrix: one lane-shifted plane per tap.
        for ky in range(3):
            for kx in range(3):
                dy = (ky - 1) * d
                dx = (kx - 1) * d
                start = pad + dy * W + dx    # vertical OOB -> zero pad region
                p = xpf_ref[:, start:start + S]            # (Cin, S)
                if dx > 0:
                    p = jnp.where(m_right, p, 0.0)         # mask row wrap
                elif dx < 0:
                    p = jnp.where(m_left, p, 0.0)
                t = ky * 3 + kx
                patch_ref[t * cin:(t + 1) * cin, :] = p

        # One MXU matmul per branch: (Cb, 9*Cin) @ (9*Cin, S) -> (Cb, S).
        y = jnp.dot(w_ref[br], patch_ref[...],
                    preferred_element_type=jnp.float32)
        y = y + b_ref[br]                                  # (Cb, 1) broadcast
        # Direct per-branch store into the output channel slice (no concat).
        o_ref[br * cb:(br + 1) * cb, :] = y.astype(o_ref.dtype)


def rmrs_pallas(x_nchw, w_mat, b_mat):
    """x_nchw: (N, C, H, W) f32; w_mat: (3, Cb, 9*C); b_mat: (3, Cb, 1)."""
    N, C, H, W = x_nchw.shape
    cb = w_mat.shape[1]
    cout = 3 * cb
    S = H * W

    # Halo covering the largest flattened tap offset (dilation 3 => 3*W + 3),
    # rounded up to a lane multiple so the interior scratch write is aligned.
    pad = ((3 * W + 3 + 127) // 128) * 128

    x_flat = x_nchw.reshape(N, C, S)      # free row-major reshape in HBM

    kernel = functools.partial(_rmrs_kernel, W=W, pad=pad)

    itemsize = 4
    vmem_est = itemsize * (
        2 * C * S + 2 * cout * S           # double-buffered in/out blocks
        + 3 * cb * 9 * C + 3 * cb          # resident weights + bias
        + C * (S + 2 * pad) + 9 * C * S)   # padded-input + patch scratch
    vmem_limit = int(min(max(4 * vmem_est, 8 << 20), 64 << 20))

    out_flat = pl.pallas_call(
        kernel,
        out_shape=jax.ShapeDtypeStruct((N, cout, S), jnp.float32),
        grid_spec=pltpu.PrefetchScalarGridSpec(
            num_scalar_prefetch=0,
            grid=(N,),
            in_specs=[
                pl.BlockSpec((None, C, S), lambda n: (n, 0, 0)),
                pl.BlockSpec((3, cb, 9 * C), lambda n: (0, 0, 0)),
                pl.BlockSpec((3, cb, 1), lambda n: (0, 0, 0)),
            ],
            out_specs=pl.BlockSpec((None, cout, S), lambda n: (n, 0, 0)),
            scratch_shapes=[
                pltpu.VMEM((C, S + 2 * pad), jnp.float32),   # padded image
                pltpu.VMEM((9 * C, S), jnp.float32),         # im2col patch
            ],
        ),
        compiler_params=pltpu.CompilerParams(
            dimension_semantics=("parallel",),
            vmem_limit_bytes=vmem_limit),
    )(x_flat, w_mat, b_mat)

    return out_flat.reshape(N, cout, H, W)


def rmrs_reference(x_nchw, w_oihw, b):
    """Pure-JAX NCHW reference; w_oihw: (3, Cb, Cin, 3, 3), b: (3, Cb)."""
    outs = []
    for br in range(3):
        d = br + 1
        y = lax.conv_general_dilated(
            x_nchw, w_oihw[br],
            window_strides=(1, 1),
            padding=((d, d), (d, d)),
            rhs_dilation=(d, d),
            dimension_numbers=("NCHW", "OIHW", "NCHW"),
        ) + b[br][None, :, None, None]
        outs.append(y)
    return jnp.concatenate(outs, axis=1)


if __name__ == "__main__":
    # Module implies NCHW input with C == out_channels, divisible by 3.
    N, C, H, W = 2, 6, 16, 16
    cb = C // 3

    key = jax.random.PRNGKey(0)
    kx, kw, kb = jax.random.split(key, 3)

    # PyTorch-style uniform init, bound 1/sqrt(fan_in).
    fan_in = C * 3 * 3
    bound = 1.0 / (fan_in ** 0.5)
    # PyTorch weight layout: (branch, Cout_b, Cin, kh, kw).
    w_oihw = jax.random.uniform(kw, (3, cb, C, 3, 3),
                                minval=-bound, maxval=bound, dtype=jnp.float32)
    b = jax.random.uniform(kb, (3, cb),
                           minval=-bound, maxval=bound, dtype=jnp.float32)

    # Kernel-side parameter layout (matches the im2col tap ordering):
    #   w_mat[br, o, (ky*3+kx)*Cin + c] = w_oihw[br, o, c, ky, kx]
    w_mat = jnp.transpose(w_oihw, (0, 1, 3, 4, 2)).reshape(3, cb, 9 * C)
    b_mat = b.reshape(3, cb, 1)

    x = jax.random.normal(kx, (N, C, H, W), dtype=jnp.float32)

    out = jax.block_until_ready(rmrs_pallas(x, w_mat, b_mat))
    ref = rmrs_reference(x, w_oihw, b)

    assert out.shape == (N, C, H, W), out.shape
    if not jnp.allclose(out, ref, atol=1e-3, rtol=1e-3):
        err = float(jnp.max(jnp.abs(out - ref)))
        raise AssertionError(
            f"Pallas RMRS output mismatch vs JAX reference (max abs err {err})")

    print("KERNEL_OK")
</pallas_src>

<mosaic_0001>
module attributes {stable_mosaic.version = 11 : i64} {
  func.func @_rmrs_kernel(%arg0: i32, %arg1: memref<1x6x256xf32, #tpu.memory_space<vmem>>, %arg2: memref<3x2x54xf32, #tpu.memory_space<vmem>>, %arg3: memref<3x2x1xf32, #tpu.memory_space<vmem>>, %arg4: memref<1x6x256xf32, #tpu.memory_space<vmem>>, %arg5: memref<6x512xf32, #tpu.memory_space<vmem>>, %arg6: memref<54x256xf32, #tpu.memory_space<vmem>>) attributes {dimension_semantics = [#tpu.dimension_semantics<parallel>], iteration_bounds = array<i64: 2>, scalar_prefetch = 0 : i64, scratch_operands = 2 : i64, tpu.core_type = #tpu.core_type<tc>, window_params = [{transform_indices = @transform_0, window_bounds = array<i64: 1, 6, 256>}, {pipeline_mode = #tpu.pipeline_mode<synchronous>, transform_indices = @transform_1, window_bounds = array<i64: 3, 2, 54>}, {pipeline_mode = #tpu.pipeline_mode<synchronous>, transform_indices = @transform_2, window_bounds = array<i64: 3, 2, 1>}, {transform_indices = @transform_3, window_bounds = array<i64: 1, 6, 256>}]} {
    %cst = arith.constant 0.000000e+00 : f32
    %0 = vector.broadcast %cst : f32 to vector<6x128xf32>
    %c0 = arith.constant 0 : index
    %c0_0 = arith.constant 0 : index
    %1 = vector.load %arg5[%c0, %c0_0] : memref<6x512xf32, #tpu.memory_space<vmem>>, vector<6x128xf32>
    tpu.vector_store %arg5[%c0, %c0_0], %0 {strides = array<i32>} : memref<6x512xf32, #tpu.memory_space<vmem>>, vector<6x128xf32>,
    %c0_1 = arith.constant 0 : index
    %c384 = arith.constant 384 : index
    %2 = vector.load %arg5[%c0_1, %c384] : memref<6x512xf32, #tpu.memory_space<vmem>>, vector<6x128xf32>
    tpu.vector_store %arg5[%c0_1, %c384], %0 {strides = array<i32>} : memref<6x512xf32, #tpu.memory_space<vmem>>, vector<6x128xf32>,
    %c0_2 = arith.constant 0 : index
    %c0_3 = arith.constant 0 : index
    %c0_4 = arith.constant 0 : index
    %3 = vector.load %arg1[%c0_2, %c0_3, %c0_4] : memref<1x6x256xf32, #tpu.memory_space<vmem>>, vector<1x6x256xf32>
    %4 = vector.shape_cast %3 : vector<1x6x256xf32> to vector<6x256xf32>
    %c0_5 = arith.constant 0 : index
    %c128 = arith.constant 128 : index
    %5 = vector.load %arg5[%c0_5, %c128] : memref<6x512xf32, #tpu.memory_space<vmem>>, vector<6x256xf32>
    tpu.vector_store %arg5[%c0_5, %c128], %4 {strides = array<i32>} : memref<6x512xf32, #tpu.memory_space<vmem>>, vector<6x256xf32>,
    %6 = tpu.iota {dimensions = array<i32: 1>} : vector<6x256xi32>
    %c16_i32 = arith.constant 16 : i32
    %c0_i32 = arith.constant 0 : i32
    %7 = arith.cmpi eq, %c16_i32, %c0_i32 : i32
    %c1_i32 = arith.constant 1 : i32
    %8 = arith.select %7, %c1_i32, %c16_i32 : i32
    %9 = vector.broadcast %8 : i32 to vector<6x256xi32>
    %10 = arith.remsi %6, %9 : vector<6x256xi32>
    %c0_i32_6 = arith.constant 0 : i32
    %11 = vector.broadcast %c0_i32_6 : i32 to vector<6x256xi32>
    %12 = arith.cmpi ne, %10, %11 : vector<6x256xi32>
    %c0_i32_7 = arith.constant 0 : i32
    %13 = vector.broadcast %c0_i32_7 : i32 to vector<6x256xi32>
    %14 = arith.cmpi slt, %10, %13 : vector<6x256xi32>
    %c0_i32_8 = arith.constant 0 : i32
    %15 = arith.cmpi slt, %8, %c0_i32_8 : i32
    %16 = vector.broadcast %15 : i1 to vector<6x256xi1>
    %17 = vector.broadcast %16 : vector<6x256xi1> to vector<6x256xi1>
    %18 = arith.xori %14, %17 : vector<6x256xi1>
    %19 = arith.andi %18, %12 : vector<6x256xi1>
    %20 = vector.broadcast %8 : i32 to vector<6x256xi32>
    %21 = arith.addi %10, %20 : vector<6x256xi32>
    %22 = arith.select %19, %21, %10 : vector<6x256xi1>, vector<6x256xi32>
    %c1_i32_9 = arith.constant 1 : i32
    %23 = vector.broadcast %c1_i32_9 : i32 to vector<6x256xi32>
    %24 = arith.cmpi sge, %22, %23 : vector<6x256xi32>
    %c15_i32 = arith.constant 15 : i32
    %25 = vector.broadcast %c15_i32 : i32 to vector<6x256xi32>
    %26 = arith.cmpi slt, %22, %25 : vector<6x256xi32>
    %c0_10 = arith.constant 0 : index
    %c111 = arith.constant 111 : index
    %27 = vector.load %arg5[%c0_10, %c111] : memref<6x512xf32, #tpu.memory_space<vmem>>, vector<6x256xf32>
    %cst_11 = arith.constant 0.000000e+00 : f32
    %28 = vector.broadcast %cst_11 : f32 to vector<6x256xf32>
    %29 = arith.select %24, %27, %28 : vector<6x256xi1>, vector<6x256xf32>
    %c0_12 = arith.constant 0 : index
    %c0_13 = arith.constant 0 : index
    %30 = vector.load %arg6[%c0_12, %c0_13] : memref<54x256xf32, #tpu.memory_space<vmem>>, vector<6x256xf32>
    tpu.vector_store %arg6[%c0_12, %c0_13], %29 {strides = array<i32>} : memref<54x256xf32, #tpu.memory_space<vmem>>, vector<6x256xf32>,
    %c0_14 = arith.constant 0 : index
    %c112 = arith.constant 112 : index
    %31 = vector.load %arg5[%c0_14, %c112] : memref<6x512xf32, #tpu.memory_space<vmem>>, vector<6x256xf32>
    %c6 = arith.constant 6 : index
    %c0_15 = arith.constant 0 : index
    %32 = vector.load %arg6[%c6, %c0_15] : memref<54x256xf32, #tpu.memory_space<vmem>>, vector<6x256xf32>
    tpu.vector_store %arg6[%c6, %c0_15], %31 {strides = array<i32>} : memref<54x256xf32, #tpu.memory_space<vmem>>, vector<6x256xf32>,
    %c0_16 = arith.constant 0 : index
    %c113 = arith.constant 113 : index
    %33 = vector.load %arg5[%c0_16, %c113] : memref<6x512xf32, #tpu.memory_space<vmem>>, vector<6x256xf32>
    %cst_17 = arith.constant 0.000000e+00 : f32
    %34 = vector.broadcast %cst_17 : f32 to vector<6x256xf32>
    %35 = arith.select %26, %33, %34 : vector<6x256xi1>, vector<6x256xf32>
    %c12 = arith.constant 12 : index
    %c0_18 = arith.constant 0 : index
    %36 = vector.load %arg6[%c12, %c0_18] : memref<54x256xf32, #tpu.memory_space<vmem>>, vector<6x256xf32>
    tpu.vector_store %arg6[%c12, %c0_18], %35 {strides = array<i32>} : memref<54x256xf32, #tpu.memory_space<vmem>>, vector<6x256xf32>,
    %c0_19 = arith.constant 0 : index
    %c127 = arith.constant 127 : index
    %37 = vector.load %arg5[%c0_19, %c127] : memref<6x512xf32, #tpu.memory_space<vmem>>, vector<6x256xf32>
    %cst_20 = arith.constant 0.000000e+00 : f32
    %38 = vector.broadcast %cst_20 : f32 to vector<6x256xf32>
    %39 = arith.select %24, %37, %38 : vector<6x256xi1>, vector<6x256xf32>
    %c18 = arith.constant 18 : index
    %c0_21 = arith.constant 0 : index
    %40 = vector.load %arg6[%c18, %c0_21] : memref<54x256xf32, #tpu.memory_space<vmem>>, vector<6x256xf32>
    tpu.vector_store %arg6[%c18, %c0_21], %39 {strides = array<i32>} : memref<54x256xf32, #tpu.memory_space<vmem>>, vector<6x256xf32>,
    %c0_22 = arith.constant 0 : index
    %c128_23 = arith.constant 128 : index
    %41 = vector.load %arg5[%c0_22, %c128_23] : memref<6x512xf32, #tpu.memory_space<vmem>>, vector<6x256xf32>
    %c24 = arith.constant 24 : index
    %c0_24 = arith.constant 0 : index
    %42 = vector.load %arg6[%c24, %c0_24] : memref<54x256xf32, #tpu.memory_space<vmem>>, vector<6x256xf32>
    tpu.vector_store %arg6[%c24, %c0_24], %41 {strides = array<i32>} : memref<54x256xf32, #tpu.memory_space<vmem>>, vector<6x256xf32>,
    %c0_25 = arith.constant 0 : index
    %c129 = arith.constant 129 : index
    %43 = vector.load %arg5[%c0_25, %c129] : memref<6x512xf32, #tpu.memory_space<vmem>>, vector<6x256xf32>
    %cst_26 = arith.constant 0.000000e+00 : f32
    %44 = vector.broadcast %cst_26 : f32 to vector<6x256xf32>
    %45 = arith.select %26, %43, %44 : vector<6x256xi1>, vector<6x256xf32>
    %c30 = arith.constant 30 : index
    %c0_27 = arith.constant 0 : index
    %46 = vector.load %arg6[%c30, %c0_27] : memref<54x256xf32, #tpu.memory_space<vmem>>, vector<6x256xf32>
    tpu.vector_store %arg6[%c30, %c0_27], %45 {strides = array<i32>} : memref<54x256xf32, #tpu.memory_space<vmem>>, vector<6x256xf32>,
    %c0_28 = arith.constant 0 : index
    %c143 = arith.constant 143 : index
    %47 = vector.load %arg5[%c0_28, %c143] : memref<6x512xf32, #tpu.memory_space<vmem>>, vector<6x256xf32>
    %cst_29 = arith.constant 0.000000e+00 : f32
    %48 = vector.broadcast %cst_29 : f32 to vector<6x256xf32>
    %49 = arith.select %24, %47, %48 : vector<6x256xi1>, vector<6x256xf32>
    %c36 = arith.constant 36 : index
    %c0_30 = arith.constant 0 : index
    %50 = vector.load %arg6[%c36, %c0_30] : memref<54x256xf32, #tpu.memory_space<vmem>>, vector<6x256xf32>
    tpu.vector_store %arg6[%c36, %c0_30], %49 {strides = array<i32>} : memref<54x256xf32, #tpu.memory_space<vmem>>, vector<6x256xf32>,
    %c0_31 = arith.constant 0 : index
    %c144 = arith.constant 144 : index
    %51 = vector.load %arg5[%c0_31, %c144] : memref<6x512xf32, #tpu.memory_space<vmem>>, vector<6x256xf32>
    %c42 = arith.constant 42 : index
    %c0_32 = arith.constant 0 : index
    %52 = vector.load %arg6[%c42, %c0_32] : memref<54x256xf32, #tpu.memory_space<vmem>>, vector<6x256xf32>
    tpu.vector_store %arg6[%c42, %c0_32], %51 {strides = array<i32>} : memref<54x256xf32, #tpu.memory_space<vmem>>, vector<6x256xf32>,
    %c0_33 = arith.constant 0 : index
    %c145 = arith.constant 145 : index
    %53 = vector.load %arg5[%c0_33, %c145] : memref<6x512xf32, #tpu.memory_space<vmem>>, vector<6x256xf32>
    %cst_34 = arith.constant 0.000000e+00 : f32
    %54 = vector.broadcast %cst_34 : f32 to vector<6x256xf32>
    %55 = arith.select %26, %53, %54 : vector<6x256xi1>, vector<6x256xf32>
    %c48 = arith.constant 48 : index
    %c0_35 = arith.constant 0 : index
    %56 = vector.load %arg6[%c48, %c0_35] : memref<54x256xf32, #tpu.memory_space<vmem>>, vector<6x256xf32>
    tpu.vector_store %arg6[%c48, %c0_35], %55 {strides = array<i32>} : memref<54x256xf32, #tpu.memory_space<vmem>>, vector<6x256xf32>,
    %c0_36 = arith.constant 0 : index
    %c0_37 = arith.constant 0 : index
    %c0_38 = arith.constant 0 : index
    %57 = vector.load %arg2[%c0_36, %c0_37, %c0_38] : memref<3x2x54xf32, #tpu.memory_space<vmem>>, vector<1x2x54xf32>
    %58 = vector.shape_cast %57 : vector<1x2x54xf32> to vector<2x54xf32>
    %c0_39 = arith.constant 0 : index
    %c0_40 = arith.constant 0 : index
    %59 = vector.load %arg6[%c0_39, %c0_40] : memref<54x256xf32, #tpu.memory_space<vmem>>, vector<54x256xf32>
    %cst_41 = arith.constant dense<0.000000e+00> : vector<2x256xf32>
    %60 = tpu.matmul %58, %59, %cst_41 {dimension_numbers = #tpu.dot_dimension_numbers<[1], [0], [0], [1], [0, 0, 1, 1], [], []>} : vector<2x54xf32>, vector<54x256xf32>, vector<2x256xf32> -> vector<2x256xf32>
    %c0_42 = arith.constant 0 : index
    %c0_43 = arith.constant 0 : index
    %c0_44 = arith.constant 0 : index
    %61 = vector.load %arg3[%c0_42, %c0_43, %c0_44] : memref<3x2x1xf32, #tpu.memory_space<vmem>>, vector<1x2x1xf32>
    %62 = vector.shape_cast %61 : vector<1x2x1xf32> to vector<2x1xf32>
    %63 = vector.broadcast %62 : vector<2x1xf32> to vector<2x256xf32>
    %64 = arith.addf %60, %63 : vector<2x256xf32>
    %c0_45 = arith.constant 0 : index
    %c0_46 = arith.constant 0 : index
    %c0_47 = arith.constant 0 : index
    %65 = vector.load %arg4[%c0_45, %c0_46, %c0_47] : memref<1x6x256xf32, #tpu.memory_space<vmem>>, vector<1x2x256xf32>
    %66 = vector.shape_cast %65 : vector<1x2x256xf32> to vector<2x256xf32>
    %67 = vector.shape_cast %64 : vector<2x256xf32> to vector<1x2x256xf32>
    tpu.vector_store %arg4[%c0_45, %c0_46, %c0_47], %67 {strides = array<i32>} : memref<1x6x256xf32, #tpu.memory_space<vmem>>, vector<1x2x256xf32>,
    %c2_i32 = arith.constant 2 : i32
    %68 = vector.broadcast %c2_i32 : i32 to vector<6x256xi32>
    %69 = arith.cmpi sge, %22, %68 : vector<6x256xi32>
    %c14_i32 = arith.constant 14 : i32
    %70 = vector.broadcast %c14_i32 : i32 to vector<6x256xi32>
    %71 = arith.cmpi slt, %22, %70 : vector<6x256xi32>
    %c0_48 = arith.constant 0 : index
    %c94 = arith.constant 94 : index
    %72 = vector.load %arg5[%c0_48, %c94] : memref<6x512xf32, #tpu.memory_space<vmem>>, vector<6x256xf32>
    %cst_49 = arith.constant 0.000000e+00 : f32
    %73 = vector.broadcast %cst_49 : f32 to vector<6x256xf32>
    %74 = arith.select %69, %72, %73 : vector<6x256xi1>, vector<6x256xf32>
    %c0_50 = arith.constant 0 : index
    %c0_51 = arith.constant 0 : index
    %75 = vector.load %arg6[%c0_50, %c0_51] : memref<54x256xf32, #tpu.memory_space<vmem>>, vector<6x256xf32>
    tpu.vector_store %arg6[%c0_50, %c0_51], %74 {strides = array<i32>} : memref<54x256xf32, #tpu.memory_space<vmem>>, vector<6x256xf32>,
    %c0_52 = arith.constant 0 : index
    %c96 = arith.constant 96 : index
    %76 = vector.load %arg5[%c0_52, %c96] : memref<6x512xf32, #tpu.memory_space<vmem>>, vector<6x256xf32>
    %c6_53 = arith.constant 6 : index
    %c0_54 = arith.constant 0 : index
    %77 = vector.load %arg6[%c6_53, %c0_54] : memref<54x256xf32, #tpu.memory_space<vmem>>, vector<6x256xf32>
    tpu.vector_store %arg6[%c6_53, %c0_54], %76 {strides = array<i32>} : memref<54x256xf32, #tpu.memory_space<vmem>>, vector<6x256xf32>,
    %c0_55 = arith.constant 0 : index
    %c98 = arith.constant 98 : index
    %78 = vector.load %arg5[%c0_55, %c98] : memref<6x512xf32, #tpu.memory_space<vmem>>, vector<6x256xf32>
    %cst_56 = arith.constant 0.000000e+00 : f32
    %79 = vector.broadcast %cst_56 : f32 to vector<6x256xf32>
    %80 = arith.select %71, %78, %79 : vector<6x256xi1>, vector<6x256xf32>
    %c12_57 = arith.constant 12 : index
    %c0_58 = arith.constant 0 : index
    %81 = vector.load %arg6[%c12_57, %c0_58] : memref<54x256xf32, #tpu.memory_space<vmem>>, vector<6x256xf32>
    tpu.vector_store %arg6[%c12_57, %c0_58], %80 {strides = array<i32>} : memref<54x256xf32, #tpu.memory_space<vmem>>, vector<6x256xf32>,
    %c0_59 = arith.constant 0 : index
    %c126 = arith.constant 126 : index
    %82 = vector.load %arg5[%c0_59, %c126] : memref<6x512xf32, #tpu.memory_space<vmem>>, vector<6x256xf32>
    %cst_60 = arith.constant 0.000000e+00 : f32
    %83 = vector.broadcast %cst_60 : f32 to vector<6x256xf32>
    %84 = arith.select %69, %82, %83 : vector<6x256xi1>, vector<6x256xf32>
    %c18_61 = arith.constant 18 : index
    %c0_62 = arith.constant 0 : index
    %85 = vector.load %arg6[%c18_61, %c0_62] : memref<54x256xf32, #tpu.memory_space<vmem>>, vector<6x256xf32>
    tpu.vector_store %arg6[%c18_61, %c0_62], %84 {strides = array<i32>} : memref<54x256xf32, #tpu.memory_space<vmem>>, vector<6x256xf32>,
    %c0_63 = arith.constant 0 : index
    %c128_64 = arith.constant 128 : index
    %86 = vector.load %arg5[%c0_63, %c128_64] : memref<6x512xf32, #tpu.memory_space<vmem>>, vector<6x256xf32>
    %c24_65 = arith.constant 24 : index
    %c0_66 = arith.constant 0 : index
    %87 = vector.load %arg6[%c24_65, %c0_66] : memref<54x256xf32, #tpu.memory_space<vmem>>, vector<6x256xf32>
    tpu.vector_store %arg6[%c24_65, %c0_66], %86 {strides = array<i32>} : memref<54x256xf32, #tpu.memory_space<vmem>>, vector<6x256xf32>,
    %c0_67 = arith.constant 0 : index
    %c130 = arith.constant 130 : index
    %88 = vector.load %arg5[%c0_67, %c130] : memref<6x512xf32, #tpu.memory_space<vmem>>, vector<6x256xf32>
    %cst_68 = arith.constant 0.000000e+00 : f32
    %89 = vector.broadcast %cst_68 : f32 to vector<6x256xf32>
    %90 = arith.select %71, %88, %89 : vector<6x256xi1>, vector<6x256xf32>
    %c30_69 = arith.constant 30 : index
    %c0_70 = arith.constant 0 : index
    %91 = vector.load %arg6[%c30_69, %c0_70] : memref<54x256xf32, #tpu.memory_space<vmem>>, vector<6x256xf32>
    tpu.vector_store %arg6[%c30_69, %c0_70], %90 {strides = array<i32>} : memref<54x256xf32, #tpu.memory_space<vmem>>, vector<6x256xf32>,
    %c0_71 = arith.constant 0 : index
    %c158 = arith.constant 158 : index
    %92 = vector.load %arg5[%c0_71, %c158] : memref<6x512xf32, #tpu.memory_space<vmem>>, vector<6x256xf32>
    %cst_72 = arith.constant 0.000000e+00 : f32
    %93 = vector.broadcast %cst_72 : f32 to vector<6x256xf32>
    %94 = arith.select %69, %92, %93 : vector<6x256xi1>, vector<6x256xf32>
    %c36_73 = arith.constant 36 : index
    %c0_74 = arith.constant 0 : index
    %95 = vector.load %arg6[%c36_73, %c0_74] : memref<54x256xf32, #tpu.memory_space<vmem>>, vector<6x256xf32>
    tpu.vector_store %arg6[%c36_73, %c0_74], %94 {strides = array<i32>} : memref<54x256xf32, #tpu.memory_space<vmem>>, vector<6x256xf32>,
    %c0_75 = arith.constant 0 : index
    %c160 = arith.constant 160 : index
    %96 = vector.load %arg5[%c0_75, %c160] : memref<6x512xf32, #tpu.memory_space<vmem>>, vector<6x256xf32>
    %c42_76 = arith.constant 42 : index
    %c0_77 = arith.constant 0 : index
    %97 = vector.load %arg6[%c42_76, %c0_77] : memref<54x256xf32, #tpu.memory_space<vmem>>, vector<6x256xf32>
    tpu.vector_store %arg6[%c42_76, %c0_77], %96 {strides = array<i32>} : memref<54x256xf32, #tpu.memory_space<vmem>>, vector<6x256xf32>,
    %c0_78 = arith.constant 0 : index
    %c162 = arith.constant 162 : index
    %98 = vector.load %arg5[%c0_78, %c162] : memref<6x512xf32, #tpu.memory_space<vmem>>, vector<6x256xf32>
    %cst_79 = arith.constant 0.000000e+00 : f32
    %99 = vector.broadcast %cst_79 : f32 to vector<6x256xf32>
    %100 = arith.select %71, %98, %99 : vector<6x256xi1>, vector<6x256xf32>
    %c48_80 = arith.constant 48 : index
    %c0_81 = arith.constant 0 : index
    %101 = vector.load %arg6[%c48_80, %c0_81] : memref<54x256xf32, #tpu.memory_space<vmem>>, vector<6x256xf32>
    tpu.vector_store %arg6[%c48_80, %c0_81], %100 {strides = array<i32>} : memref<54x256xf32, #tpu.memory_space<vmem>>, vector<6x256xf32>,
    %c1 = arith.constant 1 : index
    %c0_82 = arith.constant 0 : index
    %c0_83 = arith.constant 0 : index
    %102 = vector.load %arg2[%c1, %c0_82, %c0_83] : memref<3x2x54xf32, #tpu.memory_space<vmem>>, vector<1x2x54xf32>
    %103 = vector.shape_cast %102 : vector<1x2x54xf32> to vector<2x54xf32>
    %c0_84 = arith.constant 0 : index
    %c0_85 = arith.constant 0 : index
    %104 = vector.load %arg6[%c0_84, %c0_85] : memref<54x256xf32, #tpu.memory_space<vmem>>, vector<54x256xf32>
    %cst_86 = arith.constant dense<0.000000e+00> : vector<2x256xf32>
    %105 = tpu.matmul %103, %104, %cst_86 {dimension_numbers = #tpu.dot_dimension_numbers<[1], [0], [0], [1], [0, 0, 1, 1], [], []>} : vector<2x54xf32>, vector<54x256xf32>, vector<2x256xf32> -> vector<2x256xf32>
    %c1_87 = arith.constant 1 : index
    %c0_88 = arith.constant 0 : index
    %c0_89 = arith.constant 0 : index
    %106 = vector.load %arg3[%c1_87, %c0_88, %c0_89] : memref<3x2x1xf32, #tpu.memory_space<vmem>>, vector<1x2x1xf32>
    %107 = vector.shape_cast %106 : vector<1x2x1xf32> to vector<2x1xf32>
    %108 = vector.broadcast %107 : vector<2x1xf32> to vector<2x256xf32>
    %109 = arith.addf %105, %108 : vector<2x256xf32>
    %c0_90 = arith.constant 0 : index
    %c2 = arith.constant 2 : index
    %c0_91 = arith.constant 0 : index
    %110 = vector.load %arg4[%c0_90, %c2, %c0_91] : memref<1x6x256xf32, #tpu.memory_space<vmem>>, vector<1x2x256xf32>
    %111 = vector.shape_cast %110 : vector<1x2x256xf32> to vector<2x256xf32>
    %112 = vector.shape_cast %109 : vector<2x256xf32> to vector<1x2x256xf32>
    tpu.vector_store %arg4[%c0_90, %c2, %c0_91], %112 {strides = array<i32>} : memref<1x6x256xf32, #tpu.memory_space<vmem>>, vector<1x2x256xf32>,
    %c3_i32 = arith.constant 3 : i32
    %113 = vector.broadcast %c3_i32 : i32 to vector<6x256xi32>
    %114 = arith.cmpi sge, %22, %113 : vector<6x256xi32>
    %c13_i32 = arith.constant 13 : i32
    %115 = vector.broadcast %c13_i32 : i32 to vector<6x256xi32>
    %116 = arith.cmpi slt, %22, %115 : vector<6x256xi32>
    %c0_92 = arith.constant 0 : index
    %c77 = arith.constant 77 : index
    %117 = vector.load %arg5[%c0_92, %c77] : memref<6x512xf32, #tpu.memory_space<vmem>>, vector<6x256xf32>
    %cst_93 = arith.constant 0.000000e+00 : f32
    %118 = vector.broadcast %cst_93 : f32 to vector<6x256xf32>
    %119 = arith.select %114, %117, %118 : vector<6x256xi1>, vector<6x256xf32>
    %c0_94 = arith.constant 0 : index
    %c0_95 = arith.constant 0 : index
    %120 = vector.load %arg6[%c0_94, %c0_95] : memref<54x256xf32, #tpu.memory_space<vmem>>, vector<6x256xf32>
    tpu.vector_store %arg6[%c0_94, %c0_95], %119 {strides = array<i32>} : memref<54x256xf32, #tpu.memory_space<vmem>>, vector<6x256xf32>,
    %c0_96 = arith.constant 0 : index
    %c80 = arith.constant 80 : index
    %121 = vector.load %arg5[%c0_96, %c80] : memref<6x512xf32, #tpu.memory_space<vmem>>, vector<6x256xf32>
    %c6_97 = arith.constant 6 : index
    %c0_98 = arith.constant 0 : index
    %122 = vector.load %arg6[%c6_97, %c0_98] : memref<54x256xf32, #tpu.memory_space<vmem>>, vector<6x256xf32>
    tpu.vector_store %arg6[%c6_97, %c0_98], %121 {strides = array<i32>} : memref<54x256xf32, #tpu.memory_space<vmem>>, vector<6x256xf32>,
    %c0_99 = arith.constant 0 : index
    %c83 = arith.constant 83 : index
    %123 = vector.load %arg5[%c0_99, %c83] : memref<6x512xf32, #tpu.memory_space<vmem>>, vector<6x256xf32>
    %cst_100 = arith.constant 0.000000e+00 : f32
    %124 = vector.broadcast %cst_100 : f32 to vector<6x256xf32>
    %125 = arith.select %116, %123, %124 : vector<6x256xi1>, vector<6x256xf32>
    %c12_101 = arith.constant 12 : index
    %c0_102 = arith.constant 0 : index
    %126 = vector.load %arg6[%c12_101, %c0_102] : memref<54x256xf32, #tpu.memory_space<vmem>>, vector<6x256xf32>
    tpu.vector_store %arg6[%c12_101, %c0_102], %125 {strides = array<i32>} : memref<54x256xf32, #tpu.memory_space<vmem>>, vector<6x256xf32>,
    %c0_103 = arith.constant 0 : index
    %c125 = arith.constant 125 : index
    %127 = vector.load %arg5[%c0_103, %c125] : memref<6x512xf32, #tpu.memory_space<vmem>>, vector<6x256xf32>
    %cst_104 = arith.constant 0.000000e+00 : f32
    %128 = vector.broadcast %cst_104 : f32 to vector<6x256xf32>
    %129 = arith.select %114, %127, %128 : vector<6x256xi1>, vector<6x256xf32>
    %c18_105 = arith.constant 18 : index
    %c0_106 = arith.constant 0 : index
    %130 = vector.load %arg6[%c18_105, %c0_106] : memref<54x256xf32, #tpu.memory_space<vmem>>, vector<6x256xf32>
    tpu.vector_store %arg6[%c18_105, %c0_106], %129 {strides = array<i32>} : memref<54x256xf32, #tpu.memory_space<vmem>>, vector<6x256xf32>,
    %c0_107 = arith.constant 0 : index
    %c128_108 = arith.constant 128 : index
    %131 = vector.load %arg5[%c0_107, %c128_108] : memref<6x512xf32, #tpu.memory_space<vmem>>, vector<6x256xf32>
    %c24_109 = arith.constant 24 : index
    %c0_110 = arith.constant 0 : index
    %132 = vector.load %arg6[%c24_109, %c0_110] : memref<54x256xf32, #tpu.memory_space<vmem>>, vector<6x256xf32>
    tpu.vector_store %arg6[%c24_109, %c0_110], %131 {strides = array<i32>} : memref<54x256xf32, #tpu.memory_space<vmem>>, vector<6x256xf32>,
    %c0_111 = arith.constant 0 : index
    %c131 = arith.constant 131 : index
    %133 = vector.load %arg5[%c0_111, %c131] : memref<6x512xf32, #tpu.memory_space<vmem>>, vector<6x256xf32>
    %cst_112 = arith.constant 0.000000e+00 : f32
    %134 = vector.broadcast %cst_112 : f32 to vector<6x256xf32>
    %135 = arith.select %116, %133, %134 : vector<6x256xi1>, vector<6x256xf32>
    %c30_113 = arith.constant 30 : index
    %c0_114 = arith.constant 0 : index
    %136 = vector.load %arg6[%c30_113, %c0_114] : memref<54x256xf32, #tpu.memory_space<vmem>>, vector<6x256xf32>
    tpu.vector_store %arg6[%c30_113, %c0_114], %135 {strides = array<i32>} : memref<54x256xf32, #tpu.memory_space<vmem>>, vector<6x256xf32>,
    %c0_115 = arith.constant 0 : index
    %c173 = arith.constant 173 : index
    %137 = vector.load %arg5[%c0_115, %c173] : memref<6x512xf32, #tpu.memory_space<vmem>>, vector<6x256xf32>
    %cst_116 = arith.constant 0.000000e+00 : f32
    %138 = vector.broadcast %cst_116 : f32 to vector<6x256xf32>
    %139 = arith.select %114, %137, %138 : vector<6x256xi1>, vector<6x256xf32>
    %c36_117 = arith.constant 36 : index
    %c0_118 = arith.constant 0 : index
    %140 = vector.load %arg6[%c36_117, %c0_118] : memref<54x256xf32, #tpu.memory_space<vmem>>, vector<6x256xf32>
    tpu.vector_store %arg6[%c36_117, %c0_118], %139 {strides = array<i32>} : memref<54x256xf32, #tpu.memory_space<vmem>>, vector<6x256xf32>,
    %c0_119 = arith.constant 0 : index
    %c176 = arith.constant 176 : index
    %141 = vector.load %arg5[%c0_119, %c176] : memref<6x512xf32, #tpu.memory_space<vmem>>, vector<6x256xf32>
    %c42_120 = arith.constant 42 : index
    %c0_121 = arith.constant 0 : index
    %142 = vector.load %arg6[%c42_120, %c0_121] : memref<54x256xf32, #tpu.memory_space<vmem>>, vector<6x256xf32>
    tpu.vector_store %arg6[%c42_120, %c0_121], %141 {strides = array<i32>} : memref<54x256xf32, #tpu.memory_space<vmem>>, vector<6x256xf32>,
    %c0_122 = arith.constant 0 : index
    %c179 = arith.constant 179 : index
    %143 = vector.load %arg5[%c0_122, %c179] : memref<6x512xf32, #tpu.memory_space<vmem>>, vector<6x256xf32>
    %cst_123 = arith.constant 0.000000e+00 : f32
    %144 = vector.broadcast %cst_123 : f32 to vector<6x256xf32>
    %145 = arith.select %116, %143, %144 : vector<6x256xi1>, vector<6x256xf32>
    %c48_124 = arith.constant 48 : index
    %c0_125 = arith.constant 0 : index
    %146 = vector.load %arg6[%c48_124, %c0_125] : memref<54x256xf32, #tpu.memory_space<vmem>>, vector<6x256xf32>
    tpu.vector_store %arg6[%c48_124, %c0_125], %145 {strides = array<i32>} : memref<54x256xf32, #tpu.memory_space<vmem>>, vector<6x256xf32>,
    %c2_126 = arith.constant 2 : index
    %c0_127 = arith.constant 0 : index
    %c0_128 = arith.constant 0 : index
    %147 = vector.load %arg2[%c2_126, %c0_127, %c0_128] : memref<3x2x54xf32, #tpu.memory_space<vmem>>, vector<1x2x54xf32>
    %148 = vector.shape_cast %147 : vector<1x2x54xf32> to vector<2x54xf32>
    %c0_129 = arith.constant 0 : index
    %c0_130 = arith.constant 0 : index
    %149 = vector.load %arg6[%c0_129, %c0_130] : memref<54x256xf32, #tpu.memory_space<vmem>>, vector<54x256xf32>
    %cst_131 = arith.constant dense<0.000000e+00> : vector<2x256xf32>
    %150 = tpu.matmul %148, %149, %cst_131 {dimension_numbers = #tpu.dot_dimension_numbers<[1], [0], [0], [1], [0, 0, 1, 1], [], []>} : vector<2x54xf32>, vector<54x256xf32>, vector<2x256xf32> -> vector<2x256xf32>
    %c2_132 = arith.constant 2 : index
    %c0_133 = arith.constant 0 : index
    %c0_134 = arith.constant 0 : index
    %151 = vector.load %arg3[%c2_132, %c0_133, %c0_134] : memref<3x2x1xf32, #tpu.memory_space<vmem>>, vector<1x2x1xf32>
    %152 = vector.shape_cast %151 : vector<1x2x1xf32> to vector<2x1xf32>
    %153 = vector.broadcast %152 : vector<2x1xf32> to vector<2x256xf32>
    %154 = arith.addf %150, %153 : vector<2x256xf32>
    %c0_135 = arith.constant 0 : index
    %c4 = arith.constant 4 : index
    %c0_136 = arith.constant 0 : index
    %155 = vector.load %arg4[%c0_135, %c4, %c0_136] : memref<1x6x256xf32, #tpu.memory_space<vmem>>, vector<1x2x256xf32>
    %156 = vector.shape_cast %155 : vector<1x2x256xf32> to vector<2x256xf32>
    %157 = vector.shape_cast %154 : vector<2x256xf32> to vector<1x2x256xf32>
    tpu.vector_store %arg4[%c0_135, %c4, %c0_136], %157 {strides = array<i32>} : memref<1x6x256xf32, #tpu.memory_space<vmem>>, vector<1x2x256xf32>,
    return
  }
  func.func @transform_0(%arg0: i32) -> (i32, i32, i32) {
    %c0_i32 = arith.constant 0 : i32
    %c0_i32_0 = arith.constant 0 : i32
    %c0_i32_1 = arith.constant 0 : i32
    return %arg0, %c0_i32, %c0_i32_0 : i32, i32, i32
  }
  func.func @transform_1(%arg0: i32) -> (i32, i32, i32) {
    %c0_i32 = arith.constant 0 : i32
    %c0_i32_0 = arith.constant 0 : i32
    %c0_i32_1 = arith.constant 0 : i32
    %c0_i32_2 = arith.constant 0 : i32
    return %c0_i32, %c0_i32_0, %c0_i32_1 : i32, i32, i32
  }
  func.func @transform_2(%arg0: i32) -> (i32, i32, i32) {
    %c0_i32 = arith.constant 0 : i32
    %c0_i32_0 = arith.constant 0 : i32
    %c0_i32_1 = arith.constant 0 : i32
    %c0_i32_2 = arith.constant 0 : i32
    return %c0_i32, %c0_i32_0, %c0_i32_1 : i32, i32, i32
  }
  func.func @transform_3(%arg0: i32) -> (i32, i32, i32) {
    %c0_i32 = arith.constant 0 : i32
    %c0_i32_0 = arith.constant 0 : i32
    %c0_i32_1 = arith.constant 0 : i32
    return %arg0, %c0_i32, %c0_i32_0 : i32, i32, i32
  }
}

</mosaic_0001>

<llo_original>
// kernel: tpu_custom_call.1
$region0: #{tpu_custom_call.1}
  #allocation0 [shape = 'u32[]', space=smem, size = 0x4, offset = 0x4, fixed_abs, tag = 'smem constant byte address 0x4 - core index']
  #allocation1 [shape = 'u32[72,128]{1,0:T(1,128)}', space=vmem, size = 0x9000, scoped, tag = 'internal scratch']
  #allocation2 [shape = 'f32[6,512]{1,0:T(8,128)}', space=vmem, size = 0x4000, scoped, tag = 'scratch operand']
  #allocation3 [shape = 'f32[54,256]{1,0:T(8,128)}', space=vmem, size = 0xe000, scoped, tag = 'scratch operand']
  %s0 = inlined_call_operand.vmem [shape: f32[2,6,256], index: 0, kind: input, shape index: {}]
  %s1 = inlined_call_operand.vmem [shape: f32[3,2,54], index: 1, kind: input, shape index: {}]
  %s2 = inlined_call_operand.vmem [shape: f32[3,2,1], index: 2, kind: input, shape index: {}]
  %s3 = inlined_call_operand.vmem [shape: f32[2,6,256], index: 3, kind: output, shape index: {}]
  %s4 = sld [smem:[#allocation0]]
  $region45: #{tpu_custom_call.1} parent=0
    _
  %s6 = ssub.s32 1, %s4
  %s7 = scalar_select 0, %s6, %s4
  loop: start=0, step=1, limit=4
  $region2: #{tpu_custom_call.1} parent=0 // loop_pre_header
    _
  $region3: #{tpu_custom_call.1} parent=0 // loop_header
    %s9 = sphi 0, %s13
    %p10 = scmp.ge.s32.totalorder %s9, 4
    %s19 = sphi 0, %s21
    %s22 = sphi 0, %s19
    %s23 = sphi 0, %s22
    %s39 = sphi 0, %s23
    %s43 = sphi 0, %s43
    %s45 = sphi 0, %s43
    %s46 = sphi 0, %s45
    %s60 = sphi 0, %s46
    %s64 = sphi 0, %s64
    %s66 = sphi 0, %s64
    %s67 = sphi 0, %s66
    %s81 = sphi 0, %s67
    %s87 = sphi 0, %s89
    %s90 = sphi 0, %s87
    %s91 = sphi 0, %s90
    %s107 = sphi 0, %s91
  $region4: #{tpu_custom_call.1} parent=0 // loop_header_branch
    %12 = sbr.rel (%p10) target = $region8
  $region5: #{tpu_custom_call.1} parent=0 // loop_body
    %s14 = ssub.s32 %s9, 1
    %s15 = ssub.s32 %s9, 2
    %s16 = sadd.s32 %s9, 1
    %s17 = ssub.s32 %s9, %s16
    %p18 = scmp.eq.s32.totalorder %s17, 0
    %s20 = sadd.s32 %s19, 1
    %s21 = scalar_select %p18, %s19, %s20
    %p24 = pneg %p18
    %p25 = scmp.eq.s32.totalorder %s9, 1
    %p26 = por %p24, %p25
    %p27 = scmp.ne.s32.totalorder %s19, %s22
    %p28 = scmp.eq.s32.totalorder %s9, 0
    %p29 = por %p27, %p28
    %p30 = scmp.ne.s32.totalorder %s19, %s22
    %p31 = scmp.eq.s32.totalorder %s14, 1
    %p32 = por %p30, %p31
    %p33 = scmp.ne.s32.totalorder %s22, %s23
    %p34 = scmp.eq.s32.totalorder %s14, 0
    %p35 = por %p33, %p34
    %p36 = scmp.ne.s32.totalorder %s22, %s23
    %p37 = scmp.eq.s32.totalorder %s15, 1
    %p38 = por %p36, %p37
    %p40 = scmp.ne.s32.totalorder %s23, %s39
    %p41 = scmp.eq.s32.totalorder %s15, 0
    %p42 = por %p40, %p41
    %s44 = sadd.s32 %s43, 1
    %p47 = scmp.eq.s32.totalorder %s9, 1
    %p48 = scmp.ne.s32.totalorder %s43, %s45
    %p49 = scmp.eq.s32.totalorder %s9, 0
    %p50 = por %p48, %p49
    %p51 = scmp.ne.s32.totalorder %s43, %s45
    %p52 = scmp.eq.s32.totalorder %s14, 1
    %p53 = por %p51, %p52
    %p54 = scmp.ne.s32.totalorder %s45, %s46
    %p55 = scmp.eq.s32.totalorder %s14, 0
    %p56 = por %p54, %p55
    %p57 = scmp.ne.s32.totalorder %s45, %s46
    %p58 = scmp.eq.s32.totalorder %s15, 1
    %p59 = por %p57, %p58
    %p61 = scmp.ne.s32.totalorder %s46, %s60
    %p62 = scmp.eq.s32.totalorder %s15, 0
    %p63 = por %p61, %p62
    %s65 = sadd.s32 %s64, 1
    %p68 = scmp.eq.s32.totalorder %s9, 1
    %p69 = scmp.ne.s32.totalorder %s64, %s66
    %p70 = scmp.eq.s32.totalorder %s9, 0
    %p71 = por %p69, %p70
    %p72 = scmp.ne.s32.totalorder %s64, %s66
    %p73 = scmp.eq.s32.totalorder %s14, 1
    %p74 = por %p72, %p73
    %p75 = scmp.ne.s32.totalorder %s66, %s67
    %p76 = scmp.eq.s32.totalorder %s14, 0
    %p77 = por %p75, %p76
    %p78 = scmp.ne.s32.totalorder %s66, %s67
    %p79 = scmp.eq.s32.totalorder %s15, 1
    %p80 = por %p78, %p79
    %p82 = scmp.ne.s32.totalorder %s67, %s81
    %p83 = scmp.eq.s32.totalorder %s15, 0
    %p84 = por %p82, %p83
    %s85 = ssub.s32 %s9, %s16
    %p86 = scmp.eq.s32.totalorder %s85, 0
    %s88 = sadd.s32 %s87, 1
    %s89 = scalar_select %p86, %s87, %s88
    %p92 = pneg %p86
    %p93 = scmp.eq.s32.totalorder %s9, 1
    %p94 = por %p92, %p93
    %p95 = scmp.ne.s32.totalorder %s87, %s90
    %p96 = scmp.eq.s32.totalorder %s9, 0
    %p97 = por %p95, %p96
    %p98 = scmp.ne.s32.totalorder %s87, %s90
    %p99 = scmp.eq.s32.totalorder %s14, 1
    %p100 = por %p98, %p99
    %p101 = scmp.ne.s32.totalorder %s90, %s91
    %p102 = scmp.eq.s32.totalorder %s14, 0
    %p103 = por %p101, %p102
    %p104 = scmp.ne.s32.totalorder %s90, %s91
    %p105 = scmp.eq.s32.totalorder %s15, 1
    %p106 = por %p104, %p105
    %p108 = scmp.ne.s32.totalorder %s91, %s107
    %p109 = scmp.eq.s32.totalorder %s15, 0
    %p110 = por %p108, %p109
    %p111 = scmp.le.s32.totalorder 1, %s9
    %p112 = scmp.lt.s32.totalorder %s9, 3
    %p113 = pnand %p111, %p112
    %p114 = pneg %p113
    // Predicated region
    $region9: #{tpu_custom_call.1} parent=5 // pred_check
      _
    $region10: #{tpu_custom_call.1} parent=5 // pred_check_branch
      %116 = sbr.rel (%p113) target = $region12
    $region11: #{tpu_custom_call.1} parent=5 // pred_region
      %s117 = ssub.s32 %s9, 1
      // Predicated region
      $region13: #{tpu_custom_call.1} parent=11 // pred_check
        %p118 = pneg %p56
      $region14: #{tpu_custom_call.1} parent=11 // pred_check_branch
        %120 = sbr.rel (%p118) target = $region16
      $region15: #{tpu_custom_call.1} parent=11 // pred_region
        _
      $region16: #{tpu_custom_call.1} parent=11 // pred_fallthru
        _
      // Predicated region
      $region17: #{tpu_custom_call.1} parent=11 // pred_check
        %p121 = pneg %p77
      $region18: #{tpu_custom_call.1} parent=11 // pred_check_branch
        %123 = sbr.rel (%p121) target = $region20
      $region19: #{tpu_custom_call.1} parent=11 // pred_region
        _
      $region20: #{tpu_custom_call.1} parent=11 // pred_fallthru
        _
    $region12: #{tpu_custom_call.1} parent=5 // pred_fallthru
      _
    %p124 = scmp.lt.s32.totalorder %s9, 2
    // Predicated region
    $region21: #{tpu_custom_call.1} parent=5 // pred_check
      %p125 = pneg %p124
    $region22: #{tpu_custom_call.1} parent=5 // pred_check_branch
      %127 = sbr.rel (%p125) target = $region24
    $region23: #{tpu_custom_call.1} parent=5 // pred_region
      // Predicated region
      $region25: #{tpu_custom_call.1} parent=23 // pred_check
        %p128 = pneg %p29
      $region26: #{tpu_custom_call.1} parent=23 // pred_check_branch
        %130 = sbr.rel (%p128) target = $region28
      $region27: #{tpu_custom_call.1} parent=23 // pred_region
        %p131 = scmp.lt.s32.totalorder %s9, 1
        %s132 = scalar_select %p131, %s9, 1
        %s133 = smul.addr %s132, 2
        %s134 = smul.addr %s133, 8
        %s135 = scalar_lea.vmem %s0, %s134
      $region28: #{tpu_custom_call.1} parent=23 // pred_fallthru
        _
    $region24: #{tpu_custom_call.1} parent=5 // pred_fallthru
      _
    %p136 = scmp.le.s32.totalorder 1, %s9
    %p137 = scmp.lt.s32.totalorder %s9, 3
    %p138 = pnand %p136, %p137
    %p139 = pneg %p138
    // Predicated region
    $region29: #{tpu_custom_call.1} parent=5 // pred_check
      _
    $region30: #{tpu_custom_call.1} parent=5 // pred_check_branch
      %141 = sbr.rel (%p138) target = $region32
    $region31: #{tpu_custom_call.1} parent=5 // pred_region
      %s142 = ssub.s32 %s9, 1
      %p143 = scmp.lt.s32.totalorder %s14, 1
      %s144 = scalar_select %p143, %s14, 1
      %s145 = smul.addr %s144, 2
      %s146 = smul.addr %s145, 8
      %s147 = scalar_lea.vmem %s0, %s146
      %p148 = pneg %p35
      %p149 = pneg %p32
      %p150 = pneg %p56
      %p151 = pneg %p53
      %p152 = pneg %p77
      %p153 = pneg %p74
      %p154 = pneg %p103
      %p155 = pneg %p100
      %p156 = scmp.lt.s32.totalorder %s14, 1
      %s157 = scalar_select %p156, %s14, 1
      %s158 = smul.addr %s157, 2
      %s159 = smul.addr %s158, 8
      %s160 = scalar_lea.vmem %s3, %s159
      %p161 = scmp.lt.s32.totalorder %s14, 1
      %s162 = scalar_select %p161, %s14, 1
      %s163 = smul.addr %s162, 2
      %s164 = smul.addr %s163, 8
      %s165 = scalar_lea.vmem %s0, %s164
      %p166 = scmp.lt.s32.totalorder %s14, 1
      %s167 = scalar_select %p166, %s14, 1
      %s168 = smul.addr %s167, 2
      %s169 = smul.addr %s168, 8
      %s170 = scalar_lea.vmem %s3, %s169
      %171 = vst [vmem:[#allocation2] sm:$0x3f] 0.0
      %172 = vst [vmem:[#allocation2 + $0x18] sm:$0x3f] 0.0
      %v173 = vld [vmem:[%s165] sm:$0x3f]
      %v174 = vld [vmem:[%s165 + $0x8] sm:$0x3f]
      %175 = vst [vmem:[#allocation2 + $0x8] sm:$0x3f] %v173
      %176 = vst [vmem:[#allocation2 + $0x10] sm:$0x3f] %v174
      %v177 = vlaneseq
      %v178 = vand.u32 %v177, 127
      %v179 = vadd.s32 %v178, 128
      %vm180 = vcmp.lt.s32.totalorder %v178, 0
      %v181 = vsub.s32 0, %v178
      %v182 = vsel %vm180, %v181, %v178
      %v183 = vshrl.u32 %v182, 4
      %v184 = vand.u32 %v182, 15
      %v185 = vsub.s32 0, %v184
      %v186 = vsel %vm180, %v185, %v184
      %vm187 = vcmp.lt.s32.totalorder %v179, 0
      %v188 = vsub.s32 0, %v179
      %v189 = vsel %vm187, %v188, %v179
      %v190 = vshrl.u32 %v189, 4
      %v191 = vand.u32 %v189, 15
      %v192 = vsub.s32 0, %v191
      %v193 = vsel %vm187, %v192, %v191
      %vm194 = vcmp.ne.s32.totalorder %v186, 0
      %vm195 = vcmp.ne.s32.totalorder %v193, 0
      %vm196 = vcmp.lt.s32.totalorder %v186, 0
      %vm197 = vcmp.lt.s32.totalorder %v193, 0
      %vm198 = vmand %vm196, %vm194
      %vm199 = vmand %vm197, %vm195
      %v200 = vadd.s32 %v186, 16
      %v201 = vadd.s32 %v193, 16
      %v202 = vsel %vm198, %v200, %v186
      %v203 = vsel %vm199, %v201, %v193
      %vm204 = vcmp.ge.s32.totalorder %v202, 1
      %vm205 = vcmp.ge.s32.totalorder %v203, 1
      %vm206 = vcmp.lt.s32.totalorder %v202, 15
      %vm207 = vcmp.lt.s32.totalorder %v203, 15
      %v208 = vld [vmem:[#allocation2] sm:$0x3f]
      %v209 = vld [vmem:[#allocation2 + $0x8] sm:$0x3f]
      %v210 = vld [vmem:[#allocation2 + $0x10] sm:$0x3f]
      %214 = vrot.lane.b32.xlu0 %v208, 17
      %v215 = vpop.permute.xlu0 %214
      %216 = vrot.lane.b32.xlu0 %v209, 17
      %v217 = vpop.permute.xlu0 %216
      %218 = vrot.lane.b32.xlu0 %v210, 17
      %v219 = vpop.permute.xlu0 %218
      %vm220 = vcmask 138240
      %v221 = vsel %vm220, %v215, %v217
      %v222 = vsel %vm220, %v217, %v219
      %v225 = vsel %vm204, %v221, 0.0
      %v226 = vsel %vm205, %v222, 0.0
      %227 = vst [vmem:[#allocation3] sm:$0x3f] %v225
      %228 = vst [vmem:[#allocation3 + $0x8] sm:$0x3f] %v226
      %v229 = vld [vmem:[#allocation2] sm:$0x3f]
      %v230 = vld [vmem:[#allocation2 + $0x8] sm:$0x3f]
      %v231 = vld [vmem:[#allocation2 + $0x10] sm:$0x3f]
      %v235 = vrot.slane %v229, 2
      %v236 = vrot.slane %v230, 2
      %v237 = vrot.slane %v231, 2
      %238 = vrot.lane.b32.xlu0 %v235, 16
      %v239 = vpop.permute.xlu0 %238
      %240 = vrot.lane.b32.xlu0 %v236, 16
      %v241 = vpop.permute.xlu0 %240
      %242 = vrot.lane.b32.xlu0 %v237, 16
      %v243 = vpop.permute.xlu0 %242
      %vm244 = vcmask 130048
      %v245 = vsel %vm244, %v239, %v241
      %v246 = vsel %vm244, %v241, %v243
      %249 = vst [vmem:[#allocation3] sm:$0xc0] %v245
      %250 = vst [vmem:[#allocation3 + $0x8] sm:$0xc0] %v246
      %251 = vst [vmem:[#allocation3 + $0x10] sm:$0xf] %v245
      %252 = vst [vmem:[#allocation3 + $0x18] sm:$0xf] %v246
      %v253 = vld [vmem:[#allocation2] sm:$0x3f]
      %v254 = vld [vmem:[#allocation2 + $0x8] sm:$0x3f]
      %v255 = vld [vmem:[#allocation2 + $0x10] sm:$0x3f]
      %259 = vrot.lane.b32.xlu0 %v253, 15
      %v260 = vpop.permute.xlu0 %259
      %261 = vrot.lane.b32.xlu0 %v254, 15
      %v262 = vpop.permute.xlu0 %261
      %263 = vrot.lane.b32.xlu0 %v255, 15
      %v264 = vpop.permute.xlu0 %263
      %vm265 = vcmask 121856
      %v266 = vsel %vm265, %v260, %v262
      %v267 = vsel %vm265, %v262, %v264
      %v270 = vsel %vm206, %v266, 0.0
      %v271 = vsel %vm207, %v267, 0.0
      %v274 = vrot.slane %v270, 4
      %v275 = vrot.slane %v271, 4
      %278 = vst [vmem:[#allocation3 + $0x10] sm:$0xf0] %v274
      %279 = vst [vmem:[#allocation3 + $0x18] sm:$0xf0] %v275
      %280 = vst [vmem:[#allocation3 + $0x20] sm:$0x3] %v274
      %281 = vst [vmem:[#allocation3 + $0x28] sm:$0x3] %v275
      %v282 = vld [vmem:[#allocation2] sm:$0x3f]
      %v283 = vld [vmem:[#allocation2 + $0x8] sm:$0x3f]
      %v284 = vld [vmem:[#allocation2 + $0x10] sm:$0x3f]
      %288 = vrot.lane.b32.xlu0 %v282, 1
      %v289 = vpop.permute.xlu0 %288
      %290 = vrot.lane.b32.xlu0 %v283, 1
      %v291 = vpop.permute.xlu0 %290
      %292 = vrot.lane.b32.xlu0 %v284, 1
      %v293 = vpop.permute.xlu0 %292
      %vm294 = vcmask 7168
      %v295 = vsel %vm294, %v289, %v291
      %v296 = vsel %vm294, %v291, %v293
      %v299 = vsel %vm204, %v295, 0.0
      %v300 = vsel %vm205, %v296, 0.0
      %v303 = vrot.slane %v299, 6
      %v304 = vrot.slane %v300, 6
      %307 = vst [vmem:[#allocation3 + $0x20] sm:$0xfc] %v303
      %308 = vst [vmem:[#allocation3 + $0x28] sm:$0xfc] %v304
      %v309 = vld [vmem:[#allocation2 + $0x8] sm:$0x3f]
      %v310 = vld [vmem:[#allocation2 + $0x10] sm:$0x3f]
      %311 = vst [vmem:[#allocation3 + $0x30] sm:$0x3f] %v309
      %312 = vst [vmem:[#allocation3 + $0x38] sm:$0x3f] %v310
      %v313 = vld [vmem:[#allocation2 + $0x8] sm:$0x3f]
      %v314 = vld [vmem:[#allocation2 + $0x10] sm:$0x3f]
      %v315 = vld [vmem:[#allocation2 + $0x18] sm:$0x3f]
      %319 = vrot.lane.b32.xlu0 %v313, 127
      %v320 = vpop.permute.xlu0 %319
      %321 = vrot.lane.b32.xlu0 %v314, 127
      %v322 = vpop.permute.xlu0 %321
      %323 = vrot.lane.b32.xlu0 %v315, 127
      %v324 = vpop.permute.xlu0 %323
      %vm325 = vcmask 1039360
      %v326 = vsel %vm325, %v320, %v322
      %v327 = vsel %vm325, %v322, %v324
      %v330 = vsel %vm206, %v326, 0.0
      %v331 = vsel %vm207, %v327, 0.0
      %v334 = vrot.slane %v330, 2
      %v335 = vrot.slane %v331, 2
      %338 = vst [vmem:[#allocation3 + $0x30] sm:$0xc0] %v334
      %339 = vst [vmem:[#allocation3 + $0x38] sm:$0xc0] %v335
      %340 = vst [vmem:[#allocation3 + $0x40] sm:$0xf] %v334
      %341 = vst [vmem:[#allocation3 + $0x48] sm:$0xf] %v335
      %v342 = vld [vmem:[#allocation2 + $0x8] sm:$0x3f]
      %v343 = vld [vmem:[#allocation2 + $0x10] sm:$0x3f]
      %v344 = vld [vmem:[#allocation2 + $0x18] sm:$0x3f]
      %348 = vrot.lane.b32.xlu0 %v342, 113
      %v349 = vpop.permute.xlu0 %348
      %350 = vrot.lane.b32.xlu0 %v343, 113
      %v351 = vpop.permute.xlu0 %350
      %352 = vrot.lane.b32.xlu0 %v344, 113
      %v353 = vpop.permute.xlu0 %352
      %vm354 = vcmask 924672
      %v355 = vsel %vm354, %v349, %v351
      %v356 = vsel %vm354, %v351, %v353
      %v359 = vsel %vm204, %v355, 0.0
      %v360 = vsel %vm205, %v356, 0.0
      %v363 = vrot.slane %v359, 4
      %v364 = vrot.slane %v360, 4
      %367 = vst [vmem:[#allocation3 + $0x40] sm:$0xf0] %v363
      %368 = vst [vmem:[#allocation3 + $0x48] sm:$0xf0] %v364
      %369 = vst [vmem:[#allocation3 + $0x50] sm:$0x3] %v363
      %370 = vst [vmem:[#allocation3 + $0x58] sm:$0x3] %v364
      %v371 = vld [vmem:[#allocation2 + $0x8] sm:$0x3f]
      %v372 = vld [vmem:[#allocation2 + $0x10] sm:$0x3f]
      %v373 = vld [vmem:[#allocation2 + $0x18] sm:$0x3f]
      %v377 = vrot.slane %v371, 6
      %v378 = vrot.slane %v372, 6
      %v379 = vrot.slane %v373, 6
      %380 = vrot.lane.b32.xlu0 %v377, 112
      %v381 = vpop.permute.xlu0 %380
      %382 = vrot.lane.b32.xlu0 %v378, 112
      %v383 = vpop.permute.xlu0 %382
      %384 = vrot.lane.b32.xlu0 %v379, 112
      %v385 = vpop.permute.xlu0 %384
      %vm386 = vcmask 916480
      %v387 = vsel %vm386, %v381, %v383
      %v388 = vsel %vm386, %v383, %v385
      %391 = vst [vmem:[#allocation3 + $0x50] sm:$0xfc] %v387
      %392 = vst [vmem:[#allocation3 + $0x58] sm:$0xfc] %v388
      %v393 = vld [vmem:[#allocation2 + $0x8] sm:$0x3f]
      %v394 = vld [vmem:[#allocation2 + $0x10] sm:$0x3f]
      %v395 = vld [vmem:[#allocation2 + $0x18] sm:$0x3f]
      %399 = vrot.lane.b32.xlu0 %v393, 111
      %v400 = vpop.permute.xlu0 %399
      %401 = vrot.lane.b32.xlu0 %v394, 111
      %v402 = vpop.permute.xlu0 %401
      %403 = vrot.lane.b32.xlu0 %v395, 111
      %v404 = vpop.permute.xlu0 %403
      %vm405 = vcmask 908288
      %v406 = vsel %vm405, %v400, %v402
      %v407 = vsel %vm405, %v402, %v404
      %v410 = vsel %vm206, %v406, 0.0
      %v411 = vsel %vm207, %v407, 0.0
      %412 = vst [vmem:[#allocation3 + $0x60] sm:$0x3f] %v410
      %413 = vst [vmem:[#allocation3 + $0x68] sm:$0x3f] %v411
      %v414 = vld [vmem:[%s1] sm:$0x3]
      %v415 = vld [vmem:[#allocation3] sm:$0xff]
      %v416 = vld [vmem:[#allocation3 + $0x8] sm:$0xff]
      %v417 = vld [vmem:[#allocation3 + $0x10] sm:$0xff]
      %v418 = vld [vmem:[#allocation3 + $0x18] sm:$0xff]
      %v419 = vld [vmem:[#allocation3 + $0x20] sm:$0xff]
      %v420 = vld [vmem:[#allocation3 + $0x28] sm:$0xff]
      %v421 = vld [vmem:[#allocation3 + $0x30] sm:$0xff]
      %v422 = vld [vmem:[#allocation3 + $0x38] sm:$0xff]
      %v423 = vld [vmem:[#allocation3 + $0x40] sm:$0xff]
      %v424 = vld [vmem:[#allocation3 + $0x48] sm:$0xff]
      %v425 = vld [vmem:[#allocation3 + $0x50] sm:$0xff]
      %v426 = vld [vmem:[#allocation3 + $0x58] sm:$0xff]
      %v427 = vld [vmem:[#allocation3 + $0x60] sm:$0x3f]
      %v428 = vld [vmem:[#allocation3 + $0x68] sm:$0x3f]
      %v429 = vld [vmem:[%s2] sm:$0x3]
      %431 = vset.pattern.permute.xlu0 0
      %432 = vperm.xlu0 %431, %v429
      %v433 = vpop.permute.xlu0 %432
      %vm435 = vcmask 441344
      %v437 = vsel %vm435, %v414, 0
      %vm439 = vcmask 1045504
      %v441 = vsel %vm439, %v427, 0
      %v444 = vsel %vm439, %v428, 0
      %446 = vmatpush.msra.mxu0 0.0
      %447 = vmatpush.msra.mxu0 0.0
      %448 = vmatpush.msra.mxu0 0.0
      %449 = vmatpush.msra.mxu0 0.0
      %450 = vmatpush.msra.mxu0 0.0
      %451 = vmatpush.msra.mxu0 0.0
      %452 = vmatpush.msra.mxu0 0.0
      %453 = vmatpush.msra.mxu0 0.0
      %454 = vmatpush.msra.mxu0 0.0
      %455 = vmatpush.msra.mxu0 %v441
      %456 = vmatpush.msra.mxu0 %v425
      %457 = vmatpush.msra.mxu0 %v423
      %458 = vmatpush.msra.mxu0 %v421
      %459 = vmatpush.msra.mxu0 %v419
      %460 = vmatpush.msra.mxu0 %v417
      %461 = vmatpush.msra.mxu0 %v415
      %462 = vmatmul.f32.gmra.mxu0 %v437
      %v463 = vpop.f32.mrf.mxu0
      %v464 = vadd.f32 %v433, %v463
      %465 = vdwg.mxu0
      %466 = vmatpush.msra.mxu0 0.0
      %467 = vmatpush.msra.mxu0 0.0
      %468 = vmatpush.msra.mxu0 0.0
      %469 = vmatpush.msra.mxu0 0.0
      %470 = vmatpush.msra.mxu0 0.0
      %471 = vmatpush.msra.mxu0 0.0
      %472 = vmatpush.msra.mxu0 0.0
      %473 = vmatpush.msra.mxu0 0.0
      %474 = vmatpush.msra.mxu0 0.0
      %475 = vmatpush.msra.mxu0 %v444
      %476 = vmatpush.msra.mxu0 %v426
      %477 = vmatpush.msra.mxu0 %v424
      %478 = vmatpush.msra.mxu0 %v422
      %479 = vmatpush.msra.mxu0 %v420
      %480 = vmatpush.msra.mxu0 %v418
      %481 = vmatpush.msra.mxu0 %v416
      %482 = vmatmul.f32.gmra.mxu0 %v437
      %v483 = vpop.f32.mrf.mxu0
      %v484 = vadd.f32 %v433, %v483
      %485 = vdwg.mxu0
      %486 = vst [vmem:[%s170] sm:$0x3] %v464
      %487 = vst [vmem:[%s170 + $0x8] sm:$0x3] %v484
      %vm488 = vcmp.ge.s32.totalorder %v202, 2
      %vm489 = vcmp.ge.s32.totalorder %v203, 2
      %vm490 = vcmp.lt.s32.totalorder %v202, 14
      %vm491 = vcmp.lt.s32.totalorder %v203, 14
      %v492 = vld [vmem:[#allocation2] sm:$0x3f]
      %v493 = vld [vmem:[#allocation2 + $0x8] sm:$0x3f]
      %v494 = vld [vmem:[#allocation2 + $0x10] sm:$0x3f]
      %498 = vrot.lane.b32.xlu0 %v492, 34
      %v499 = vpop.permute.xlu0 %498
      %500 = vrot.lane.b32.xlu0 %v493, 34
      %v501 = vpop.permute.xlu0 %500
      %502 = vrot.lane.b32.xlu0 %v494, 34
      %v503 = vpop.permute.xlu0 %502
      %vm504 = vcmask 277504
      %v505 = vsel %vm504, %v499, %v501
      %v506 = vsel %vm504, %v501, %v503
      %v509 = vsel %vm488, %v505, 0.0
      %v510 = vsel %vm489, %v506, 0.0
      %511 = vst [vmem:[#allocation3] sm:$0x3f] %v509
      %512 = vst [vmem:[#allocation3 + $0x8] sm:$0x3f] %v510
      %v513 = vld [vmem:[#allocation2] sm:$0x3f]
      %v514 = vld [vmem:[#allocation2 + $0x8] sm:$0x3f]
      %v515 = vld [vmem:[#allocation2 + $0x10] sm:$0x3f]
      %v519 = vrot.slane %v513, 2
      %v520 = vrot.slane %v514, 2
      %v521 = vrot.slane %v515, 2
      %522 = vrot.lane.b32.xlu0 %v519, 32
      %v523 = vpop.permute.xlu0 %522
      %524 = vrot.lane.b32.xlu0 %v520, 32
      %v525 = vpop.permute.xlu0 %524
      %526 = vrot.lane.b32.xlu0 %v521, 32
      %v527 = vpop.permute.xlu0 %526
      %vm528 = vcmask 261120
      %v529 = vsel %vm528, %v523, %v525
      %v530 = vsel %vm528, %v525, %v527
      %533 = vst [vmem:[#allocation3] sm:$0xc0] %v529
      %534 = vst [vmem:[#allocation3 + $0x8] sm:$0xc0] %v530
      %535 = vst [vmem:[#allocation3 + $0x10] sm:$0xf] %v529
      %536 = vst [vmem:[#allocation3 + $0x18] sm:$0xf] %v530
      %v537 = vld [vmem:[#allocation2] sm:$0x3f]
      %v538 = vld [vmem:[#allocation2 + $0x8] sm:$0x3f]
      %v539 = vld [vmem:[#allocation2 + $0x10] sm:$0x3f]
      %543 = vrot.lane.b32.xlu0 %v537, 30
      %v544 = vpop.permute.xlu0 %543
      %545 = vrot.lane.b32.xlu0 %v538, 30
      %v546 = vpop.permute.xlu0 %545
      %547 = vrot.lane.b32.xlu0 %v539, 30
      %v548 = vpop.permute.xlu0 %547
      %vm549 = vcmask 244736
      %v550 = vsel %vm549, %v544, %v546
      %v551 = vsel %vm549, %v546, %v548
      %v554 = vsel %vm490, %v550, 0.0
      %v555 = vsel %vm491, %v551, 0.0
      %v558 = vrot.slane %v554, 4
      %v559 = vrot.slane %v555, 4
      %562 = vst [vmem:[#allocation3 + $0x10] sm:$0xf0] %v558
      %563 = vst [vmem:[#allocation3 + $0x18] sm:$0xf0] %v559
      %564 = vst [vmem:[#allocation3 + $0x20] sm:$0x3] %v558
      %565 = vst [vmem:[#allocation3 + $0x28] sm:$0x3] %v559
      %v566 = vld [vmem:[#allocation2] sm:$0x3f]
      %v567 = vld [vmem:[#allocation2 + $0x8] sm:$0x3f]
      %v568 = vld [vmem:[#allocation2 + $0x10] sm:$0x3f]
      %572 = vrot.lane.b32.xlu0 %v566, 2
      %v573 = vpop.permute.xlu0 %572
      %574 = vrot.lane.b32.xlu0 %v567, 2
      %v575 = vpop.permute.xlu0 %574
      %576 = vrot.lane.b32.xlu0 %v568, 2
      %v577 = vpop.permute.xlu0 %576
      %vm578 = vcmask 15360
      %v579 = vsel %vm578, %v573, %v575
      %v580 = vsel %vm578, %v575, %v577
      %v583 = vsel %vm488, %v579, 0.0
      %v584 = vsel %vm489, %v580, 0.0
      %v587 = vrot.slane %v583, 6
      %v588 = vrot.slane %v584, 6
      %591 = vst [vmem:[#allocation3 + $0x20] sm:$0xfc] %v587
      %592 = vst [vmem:[#allocation3 + $0x28] sm:$0xfc] %v588
      %v593 = vld [vmem:[#allocation2 + $0x8] sm:$0x3f]
      %v594 = vld [vmem:[#allocation2 + $0x10] sm:$0x3f]
      %595 = vst [vmem:[#allocation3 + $0x30] sm:$0x3f] %v593
      %596 = vst [vmem:[#allocation3 + $0x38] sm:$0x3f] %v594
      %v597 = vld [vmem:[#allocation2 + $0x8] sm:$0x3f]
      %v598 = vld [vmem:[#allocation2 + $0x10] sm:$0x3f]
      %v599 = vld [vmem:[#allocation2 + $0x18] sm:$0x3f]
      %603 = vrot.lane.b32.xlu0 %v597, 126
      %v604 = vpop.permute.xlu0 %603
      %605 = vrot.lane.b32.xlu0 %v598, 126
      %v606 = vpop.permute.xlu0 %605
      %607 = vrot.lane.b32.xlu0 %v599, 126
      %v608 = vpop.permute.xlu0 %607
      %vm609 = vcmask 1031168
      %v610 = vsel %vm609, %v604, %v606
      %v611 = vsel %vm609, %v606, %v608
      %v614 = vsel %vm490, %v610, 0.0
      %v615 = vsel %vm491, %v611, 0.0
      %v618 = vrot.slane %v614, 2
      %v619 = vrot.slane %v615, 2
      %622 = vst [vmem:[#allocation3 + $0x30] sm:$0xc0] %v618
      %623 = vst [vmem:[#allocation3 + $0x38] sm:$0xc0] %v619
      %624 = vst [vmem:[#allocation3 + $0x40] sm:$0xf] %v618
      %625 = vst [vmem:[#allocation3 + $0x48] sm:$0xf] %v619
      %v626 = vld [vmem:[#allocation2 + $0x8] sm:$0x3f]
      %v627 = vld [vmem:[#allocation2 + $0x10] sm:$0x3f]
      %v628 = vld [vmem:[#allocation2 + $0x18] sm:$0x3f]
      %632 = vrot.lane.b32.xlu0 %v626, 98
      %v633 = vpop.permute.xlu0 %632
      %634 = vrot.lane.b32.xlu0 %v627, 98
      %v635 = vpop.permute.xlu0 %634
      %636 = vrot.lane.b32.xlu0 %v628, 98
      %v637 = vpop.permute.xlu0 %636
      %vm638 = vcmask 801792
      %v639 = vsel %vm638, %v633, %v635
      %v640 = vsel %vm638, %v635, %v637
      %v643 = vsel %vm488, %v639, 0.0
      %v644 = vsel %vm489, %v640, 0.0
      %v647 = vrot.slane %v643, 4
      %v648 = vrot.slane %v644, 4
      %651 = vst [vmem:[#allocation3 + $0x40] sm:$0xf0] %v647
      %652 = vst [vmem:[#allocation3 + $0x48] sm:$0xf0] %v648
      %653 = vst [vmem:[#allocation3 + $0x50] sm:$0x3] %v647
      %654 = vst [vmem:[#allocation3 + $0x58] sm:$0x3] %v648
      %v655 = vld [vmem:[#allocation2 + $0x8] sm:$0x3f]
      %v656 = vld [vmem:[#allocation2 + $0x10] sm:$0x3f]
      %v657 = vld [vmem:[#allocation2 + $0x18] sm:$0x3f]
      %v661 = vrot.slane %v655, 6
      %v662 = vrot.slane %v656, 6
      %v663 = vrot.slane %v657, 6
      %664 = vrot.lane.b32.xlu0 %v661, 96
      %v665 = vpop.permute.xlu0 %664
      %666 = vrot.lane.b32.xlu0 %v662, 96
      %v667 = vpop.permute.xlu0 %666
      %668 = vrot.lane.b32.xlu0 %v663, 96
      %v669 = vpop.permute.xlu0 %668
      %vm670 = vcmask 785408
      %v671 = vsel %vm670, %v665, %v667
      %v672 = vsel %vm670, %v667, %v669
      %675 = vst [vmem:[#allocation3 + $0x50] sm:$0xfc] %v671
      %676 = vst [vmem:[#allocation3 + $0x58] sm:$0xfc] %v672
      %v677 = vld [vmem:[#allocation2 + $0x8] sm:$0x3f]
      %v678 = vld [vmem:[#allocation2 + $0x10] sm:$0x3f]
      %v679 = vld [vmem:[#allocation2 + $0x18] sm:$0x3f]
      %683 = vrot.lane.b32.xlu0 %v677, 94
      %v684 = vpop.permute.xlu0 %683
      %685 = vrot.lane.b32.xlu0 %v678, 94
      %v686 = vpop.permute.xlu0 %685
      %687 = vrot.lane.b32.xlu0 %v679, 94
      %v688 = vpop.permute.xlu0 %687
      %vm689 = vcmask 769024
      %v690 = vsel %vm689, %v684, %v686
      %v691 = vsel %vm689, %v686, %v688
      %v694 = vsel %vm490, %v690, 0.0
      %v695 = vsel %vm491, %v691, 0.0
      %696 = vst [vmem:[#allocation3 + $0x60] sm:$0x3f] %v694
      %697 = vst [vmem:[#allocation3 + $0x68] sm:$0x3f] %v695
      %s698 = scalar_lea.vmem %s1, 2
      %v699 = vld [vmem:[%s698] sm:$0x3]
      %v700 = vld [vmem:[#allocation3] sm:$0xff]
      %v701 = vld [vmem:[#allocation3 + $0x8] sm:$0xff]
      %v702 = vld [vmem:[#allocation3 + $0x10] sm:$0xff]
      %v703 = vld [vmem:[#allocation3 + $0x18] sm:$0xff]
      %v704 = vld [vmem:[#allocation3 + $0x20] sm:$0xff]
      %v705 = vld [vmem:[#allocation3 + $0x28] sm:$0xff]
      %v706 = vld [vmem:[#allocation3 + $0x30] sm:$0xff]
      %v707 = vld [vmem:[#allocation3 + $0x38] sm:$0xff]
      %v708 = vld [vmem:[#allocation3 + $0x40] sm:$0xff]
      %v709 = vld [vmem:[#allocation3 + $0x48] sm:$0xff]
      %v710 = vld [vmem:[#allocation3 + $0x50] sm:$0xff]
      %v711 = vld [vmem:[#allocation3 + $0x58] sm:$0xff]
      %v712 = vld [vmem:[#allocation3 + $0x60] sm:$0x3f]
      %v713 = vld [vmem:[#allocation3 + $0x68] sm:$0x3f]
      %s714 = scalar_lea.vmem %s2, 2
      %v715 = vld [vmem:[%s714] sm:$0x3]
      %717 = vset.pattern.permute.xlu0 0
      %718 = vperm.xlu0 %717, %v715
      %v719 = vpop.permute.xlu0 %718
      %v722 = vsel %vm435, %v699, 0
      %v725 = vsel %vm439, %v712, 0
      %v728 = vsel %vm439, %v713, 0
      %730 = vmatpush.msra.mxu0 0.0
      %731 = vmatpush.msra.mxu0 0.0
      %732 = vmatpush.msra.mxu0 0.0
      %733 = vmatpush.msra.mxu0 0.0
      %734 = vmatpush.msra.mxu0 0.0
      %735 = vmatpush.msra.mxu0 0.0
      %736 = vmatpush.msra.mxu0 0.0
      %737 = vmatpush.msra.mxu0 0.0
      %738 = vmatpush.msra.mxu0 0.0
      %739 = vmatpush.msra.mxu0 %v725
      %740 = vmatpush.msra.mxu0 %v710
      %741 = vmatpush.msra.mxu0 %v708
      %742 = vmatpush.msra.mxu0 %v706
      %743 = vmatpush.msra.mxu0 %v704
      %744 = vmatpush.msra.mxu0 %v702
      %745 = vmatpush.msra.mxu0 %v700
      %746 = vmatmul.f32.gmra.mxu0 %v722
      %v747 = vpop.f32.mrf.mxu0
      %v748 = vadd.f32 %v719, %v747
      %749 = vdwg.mxu0
      %750 = vmatpush.msra.mxu0 0.0
      %751 = vmatpush.msra.mxu0 0.0
      %752 = vmatpush.msra.mxu0 0.0
      %753 = vmatpush.msra.mxu0 0.0
      %754 = vmatpush.msra.mxu0 0.0
      %755 = vmatpush.msra.mxu0 0.0
      %756 = vmatpush.msra.mxu0 0.0
      %757 = vmatpush.msra.mxu0 0.0
      %758 = vmatpush.msra.mxu0 0.0
      %759 = vmatpush.msra.mxu0 %v728
      %760 = vmatpush.msra.mxu0 %v711
      %761 = vmatpush.msra.mxu0 %v709
      %762 = vmatpush.msra.mxu0 %v707
      %763 = vmatpush.msra.mxu0 %v705
      %764 = vmatpush.msra.mxu0 %v703
      %765 = vmatpush.msra.mxu0 %v701
      %766 = vmatmul.f32.gmra.mxu0 %v722
      %v767 = vpop.f32.mrf.mxu0
      %v768 = vadd.f32 %v719, %v767
      %769 = vdwg.mxu0
      %v772 = vrot.slane %v748, 6
      %v773 = vrot.slane %v768, 6
      %776 = vst [vmem:[%s170] sm:$0xc] %v772
      %777 = vst [vmem:[%s170 + $0x8] sm:$0xc] %v773
      %vm778 = vcmp.ge.s32.totalorder %v202, 3
      %vm779 = vcmp.ge.s32.totalorder %v203, 3
      %vm780 = vcmp.lt.s32.totalorder %v202, 13
      %vm781 = vcmp.lt.s32.totalorder %v203, 13
      %v782 = vld [vmem:[#allocation2] sm:$0x3f]
      %v783 = vld [vmem:[#allocation2 + $0x8] sm:$0x3f]
      %v784 = vld [vmem:[#allocation2 + $0x10] sm:$0x3f]
      %788 = vrot.lane.b32.xlu0 %v782, 51
      %v789 = vpop.permute.xlu0 %788
      %790 = vrot.lane.b32.xlu0 %v783, 51
      %v791 = vpop.permute.xlu0 %790
      %792 = vrot.lane.b32.xlu0 %v784, 51
      %v793 = vpop.permute.xlu0 %792
      %vm794 = vcmask 416768
      %v795 = vsel %vm794, %v789, %v791
      %v796 = vsel %vm794, %v791, %v793
      %v799 = vsel %vm778, %v795, 0.0
      %v800 = vsel %vm779, %v796, 0.0
      %801 = vst [vmem:[#allocation3] sm:$0x3f] %v799
      %802 = vst [vmem:[#allocation3 + $0x8] sm:$0x3f] %v800
      %v803 = vld [vmem:[#allocation2] sm:$0x3f]
      %v804 = vld [vmem:[#allocation2 + $0x8] sm:$0x3f]
      %v805 = vld [vmem:[#allocation2 + $0x10] sm:$0x3f]
      %v809 = vrot.slane %v803, 2
      %v810 = vrot.slane %v804, 2
      %v811 = vrot.slane %v805, 2
      %812 = vrot.lane.b32.xlu0 %v809, 48
      %v813 = vpop.permute.xlu0 %812
      %814 = vrot.lane.b32.xlu0 %v810, 48
      %v815 = vpop.permute.xlu0 %814
      %816 = vrot.lane.b32.xlu0 %v811, 48
      %v817 = vpop.permute.xlu0 %816
      %vm818 = vcmask 392192
      %v819 = vsel %vm818, %v813, %v815
      %v820 = vsel %vm818, %v815, %v817
      %823 = vst [vmem:[#allocation3] sm:$0xc0] %v819
      %824 = vst [vmem:[#allocation3 + $0x8] sm:$0xc0] %v820
      %825 = vst [vmem:[#allocation3 + $0x10] sm:$0xf] %v819
      %826 = vst [vmem:[#allocation3 + $0x18] sm:$0xf] %v820
      %v827 = vld [vmem:[#allocation2] sm:$0x3f]
      %v828 = vld [vmem:[#allocation2 + $0x8] sm:$0x3f]
      %v829 = vld [vmem:[#allocation2 + $0x10] sm:$0x3f]
      %833 = vrot.lane.b32.xlu0 %v827, 45
      %v834 = vpop.permute.xlu0 %833
      %835 = vrot.lane.b32.xlu0 %v828, 45
      %v836 = vpop.permute.xlu0 %835
      %837 = vrot.lane.b32.xlu0 %v829, 45
      %v838 = vpop.permute.xlu0 %837
      %vm839 = vcmask 367616
      %v840 = vsel %vm839, %v834, %v836
      %v841 = vsel %vm839, %v836, %v838
      %v844 = vsel %vm780, %v840, 0.0
      %v845 = vsel %vm781, %v841, 0.0
      %v848 = vrot.slane %v844, 4
      %v849 = vrot.slane %v845, 4
      %852 = vst [vmem:[#allocation3 + $0x10] sm:$0xf0] %v848
      %853 = vst [vmem:[#allocation3 + $0x18] sm:$0xf0] %v849
      %854 = vst [vmem:[#allocation3 + $0x20] sm:$0x3] %v848
      %855 = vst [vmem:[#allocation3 + $0x28] sm:$0x3] %v849
      %v856 = vld [vmem:[#allocation2] sm:$0x3f]
      %v857 = vld [vmem:[#allocation2 + $0x8] sm:$0x3f]
      %v858 = vld [vmem:[#allocation2 + $0x10] sm:$0x3f]
      %862 = vrot.lane.b32.xlu0 %v856, 3
      %v863 = vpop.permute.xlu0 %862
      %864 = vrot.lane.b32.xlu0 %v857, 3
      %v865 = vpop.permute.xlu0 %864
      %866 = vrot.lane.b32.xlu0 %v858, 3
      %v867 = vpop.permute.xlu0 %866
      %vm868 = vcmask 23552
      %v869 = vsel %vm868, %v863, %v865
      %v870 = vsel %vm868, %v865, %v867
      %v873 = vsel %vm778, %v869, 0.0
      %v874 = vsel %vm779, %v870, 0.0
      %v877 = vrot.slane %v873, 6
      %v878 = vrot.slane %v874, 6
      %881 = vst [vmem:[#allocation3 + $0x20] sm:$0xfc] %v877
      %882 = vst [vmem:[#allocation3 + $0x28] sm:$0xfc] %v878
      %v883 = vld [vmem:[#allocation2 + $0x8] sm:$0x3f]
      %v884 = vld [vmem:[#allocation2 + $0x10] sm:$0x3f]
      %885 = vst [vmem:[#allocation3 + $0x30] sm:$0x3f] %v883
      %886 = vst [vmem:[#allocation3 + $0x38] sm:$0x3f] %v884
      %v887 = vld [vmem:[#allocation2 + $0x8] sm:$0x3f]
      %v888 = vld [vmem:[#allocation2 + $0x10] sm:$0x3f]
      %v889 = vld [vmem:[#allocation2 + $0x18] sm:$0x3f]
      %893 = vrot.lane.b32.xlu0 %v887, 125
      %v894 = vpop.permute.xlu0 %893
      %895 = vrot.lane.b32.xlu0 %v888, 125
      %v896 = vpop.permute.xlu0 %895
      %897 = vrot.lane.b32.xlu0 %v889, 125
      %v898 = vpop.permute.xlu0 %897
      %vm899 = vcmask 1022976
      %v900 = vsel %vm899, %v894, %v896
      %v901 = vsel %vm899, %v896, %v898
      %v904 = vsel %vm780, %v900, 0.0
      %v905 = vsel %vm781, %v901, 0.0
      %v908 = vrot.slane %v904, 2
      %v909 = vrot.slane %v905, 2
      %912 = vst [vmem:[#allocation3 + $0x30] sm:$0xc0] %v908
      %913 = vst [vmem:[#allocation3 + $0x38] sm:$0xc0] %v909
      %914 = vst [vmem:[#allocation3 + $0x40] sm:$0xf] %v908
      %915 = vst [vmem:[#allocation3 + $0x48] sm:$0xf] %v909
      %v916 = vld [vmem:[#allocation2 + $0x8] sm:$0x3f]
      %v917 = vld [vmem:[#allocation2 + $0x10] sm:$0x3f]
      %v918 = vld [vmem:[#allocation2 + $0x18] sm:$0x3f]
      %922 = vrot.lane.b32.xlu0 %v916, 83
      %v923 = vpop.permute.xlu0 %922
      %924 = vrot.lane.b32.xlu0 %v917, 83
      %v925 = vpop.permute.xlu0 %924
      %926 = vrot.lane.b32.xlu0 %v918, 83
      %v927 = vpop.permute.xlu0 %926
      %vm928 = vcmask 678912
      %v929 = vsel %vm928, %v923, %v925
      %v930 = vsel %vm928, %v925, %v927
      %v933 = vsel %vm778, %v929, 0.0
      %v934 = vsel %vm779, %v930, 0.0
      %v937 = vrot.slane %v933, 4
      %v938 = vrot.slane %v934, 4
      %941 = vst [vmem:[#allocation3 + $0x40] sm:$0xf0] %v937
      %942 = vst [vmem:[#allocation3 + $0x48] sm:$0xf0] %v938
      %943 = vst [vmem:[#allocation3 + $0x50] sm:$0x3] %v937
      %944 = vst [vmem:[#allocation3 + $0x58] sm:$0x3] %v938
      %v945 = vld [vmem:[#allocation2 + $0x8] sm:$0x3f]
      %v946 = vld [vmem:[#allocation2 + $0x10] sm:$0x3f]
      %v947 = vld [vmem:[#allocation2 + $0x18] sm:$0x3f]
      %v951 = vrot.slane %v945, 6
      %v952 = vrot.slane %v946, 6
      %v953 = vrot.slane %v947, 6
      %954 = vrot.lane.b32.xlu0 %v951, 80
      %v955 = vpop.permute.xlu0 %954
      %956 = vrot.lane.b32.xlu0 %v952, 80
      %v957 = vpop.permute.xlu0 %956
      %958 = vrot.lane.b32.xlu0 %v953, 80
      %v959 = vpop.permute.xlu0 %958
      %vm960 = vcmask 654336
      %v961 = vsel %vm960, %v955, %v957
      %v962 = vsel %vm960, %v957, %v959
      %965 = vst [vmem:[#allocation3 + $0x50] sm:$0xfc] %v961
      %966 = vst [vmem:[#allocation3 + $0x58] sm:$0xfc] %v962
      %v967 = vld [vmem:[#allocation2 + $0x8] sm:$0x3f]
      %v968 = vld [vmem:[#allocation2 + $0x10] sm:$0x3f]
      %v969 = vld [vmem:[#allocation2 + $0x18] sm:$0x3f]
      %973 = vrot.lane.b32.xlu0 %v967, 77
      %v974 = vpop.permute.xlu0 %973
      %975 = vrot.lane.b32.xlu0 %v968, 77
      %v976 = vpop.permute.xlu0 %975
      %977 = vrot.lane.b32.xlu0 %v969, 77
      %v978 = vpop.permute.xlu0 %977
      %vm979 = vcmask 629760
      %v980 = vsel %vm979, %v974, %v976
      %v981 = vsel %vm979, %v976, %v978
      %v984 = vsel %vm780, %v980, 0.0
      %v985 = vsel %vm781, %v981, 0.0
      %986 = vst [vmem:[#allocation3 + $0x60] sm:$0x3f] %v984
      %987 = vst [vmem:[#allocation3 + $0x68] sm:$0x3f] %v985
      %s988 = scalar_lea.vmem %s1, 4
      %v989 = vld [vmem:[%s988] sm:$0x3]
      %v990 = vld [vmem:[#allocation3] sm:$0xff]
      %v991 = vld [vmem:[#allocation3 + $0x8] sm:$0xff]
      %v992 = vld [vmem:[#allocation3 + $0x10] sm:$0xff]
      %v993 = vld [vmem:[#allocation3 + $0x18] sm:$0xff]
      %v994 = vld [vmem:[#allocation3 + $0x20] sm:$0xff]
      %v995 = vld [vmem:[#allocation3 + $0x28] sm:$0xff]
      %v996 = vld [vmem:[#allocation3 + $0x30] sm:$0xff]
      %v997 = vld [vmem:[#allocation3 + $0x38] sm:$0xff]
      %v998 = vld [vmem:[#allocation3 + $0x40] sm:$0xff]
      %v999 = vld [vmem:[#allocation3 + $0x48] sm:$0xff]
      %v1000 = vld [vmem:[#allocation3 + $0x50] sm:$0xff]
      %v1001 = vld [vmem:[#allocation3 + $0x58] sm:$0xff]
      %v1002 = vld [vmem:[#allocation3 + $0x60] sm:$0x3f]
      %v1003 = vld [vmem:[#allocation3 + $0x68] sm:$0x3f]
      %s1004 = scalar_lea.vmem %s2, 4
      %v1005 = vld [vmem:[%s1004] sm:$0x3]
      %1007 = vset.pattern.permute.xlu0 0
      %1008 = vperm.xlu0 %1007, %v1005
      %v1009 = vpop.permute.xlu0 %1008
      %v1012 = vsel %vm435, %v989, 0
      %v1015 = vsel %vm439, %v1002, 0
      %v1018 = vsel %vm439, %v1003, 0
      %1020 = vmatpush.msra.mxu0 0.0
      %1021 = vmatpush.msra.mxu0 0.0
      %1022 = vmatpush.msra.mxu0 0.0
      %1023 = vmatpush.msra.mxu0 0.0
      %1024 = vmatpush.msra.mxu0 0.0
      %1025 = vmatpush.msra.mxu0 0.0
      %1026 = vmatpush.msra.mxu0 0.0
      %1027 = vmatpush.msra.mxu0 0.0
      %1028 = vmatpush.msra.mxu0 0.0
      %1029 = vmatpush.msra.mxu0 %v1015
      %1030 = vmatpush.msra.mxu0 %v1000
      %1031 = vmatpush.msra.mxu0 %v998
      %1032 = vmatpush.msra.mxu0 %v996
      %1033 = vmatpush.msra.mxu0 %v994
      %1034 = vmatpush.msra.mxu0 %v992
      %1035 = vmatpush.msra.mxu0 %v990
      %1036 = vmatmul.f32.gmra.mxu0 %v1012
      %v1037 = vpop.f32.mrf.mxu0
      %v1038 = vadd.f32 %v1009, %v1037
      %1039 = vdwg.mxu0
      %1040 = vmatpush.msra.mxu0 0.0
      %1041 = vmatpush.msra.mxu0 0.0
      %1042 = vmatpush.msra.mxu0 0.0
      %1043 = vmatpush.msra.mxu0 0.0
      %1044 = vmatpush.msra.mxu0 0.0
      %1045 = vmatpush.msra.mxu0 0.0
      %1046 = vmatpush.msra.mxu0 0.0
      %1047 = vmatpush.msra.mxu0 0.0
      %1048 = vmatpush.msra.mxu0 0.0
      %1049 = vmatpush.msra.mxu0 %v1018
      %1050 = vmatpush.msra.mxu0 %v1001
      %1051 = vmatpush.msra.mxu0 %v999
      %1052 = vmatpush.msra.mxu0 %v997
      %1053 = vmatpush.msra.mxu0 %v995
      %1054 = vmatpush.msra.mxu0 %v993
      %1055 = vmatpush.msra.mxu0 %v991
      %1056 = vmatmul.f32.gmra.mxu0 %v1012
      %v1057 = vpop.f32.mrf.mxu0
      %v1058 = vadd.f32 %v1009, %v1057
      %1059 = vdwg.mxu0
      %v1062 = vrot.slane %v1038, 4
      %v1063 = vrot.slane %v1058, 4
      %1066 = vst [vmem:[%s170] sm:$0x30] %v1062
      %1067 = vst [vmem:[%s170 + $0x8] sm:$0x30] %v1063
      %p1068 = scmp.lt.s32.totalorder %s14, 1
      %s1069 = scalar_select %p1068, %s14, 1
      %s1070 = smul.addr %s1069, 2
      %s1071 = smul.addr %s1070, 8
      %s1072 = scalar_lea.vmem %s3, %s1071
      // Predicated region
      $region33: #{tpu_custom_call.1} parent=31 // pred_check
        %p1073 = pneg %p100
      $region34: #{tpu_custom_call.1} parent=31 // pred_check_branch
        %1075 = sbr.rel (%p1073) target = $region36
      $region35: #{tpu_custom_call.1} parent=31 // pred_region
        _
      $region36: #{tpu_custom_call.1} parent=31 // pred_fallthru
        _
    $region32: #{tpu_custom_call.1} parent=5 // pred_fallthru
      _
    %p1076 = scmp.le.s32.totalorder 2, %s9
    // Predicated region
    $region37: #{tpu_custom_call.1} parent=5 // pred_check
      %p1077 = pneg %p1076
    $region38: #{tpu_custom_call.1} parent=5 // pred_check_branch
      %1079 = sbr.rel (%p1077) target = $region40
    $region39: #{tpu_custom_call.1} parent=5 // pred_region
      %s1080 = ssub.s32 %s9, 2
      // Predicated region
      $region41: #{tpu_custom_call.1} parent=39 // pred_check
        %p1081 = pneg %p106
      $region42: #{tpu_custom_call.1} parent=39 // pred_check_branch
        %1083 = sbr.rel (%p1081) target = $region44
      $region43: #{tpu_custom_call.1} parent=39 // pred_region
        %p1084 = scmp.lt.s32.totalorder %s15, 1
        %s1085 = scalar_select %p1084, %s15, 1
        %s1086 = smul.addr %s1085, 2
        %s1087 = smul.addr %s1086, 8
        %s1088 = scalar_lea.vmem %s3, %s1087
      $region44: #{tpu_custom_call.1} parent=39 // pred_fallthru
        _
    $region40: #{tpu_custom_call.1} parent=5 // pred_fallthru
      _
  $region6: #{tpu_custom_call.1} parent=0 // loop_footer
    %s13 = sadd.s32 1, %s9
  $region7: #{tpu_custom_call.1} parent=0 // loop_footer_branch
    %8 = sbr.rel target = $region3
  $region8: #{tpu_custom_call.1} parent=0 // loop_exit
    _

</llo_original>
